<compile_context>
chip_gen: v5e
topology: v5e:2x2
jax: 0.10.0
libtpu: 0.0.40
codegen_flags: <defaults>
</compile_context>

<pallas_src>
import numpy as np
import jax
import jax.numpy as jnp
from jax.experimental import pallas as pl
from jax.experimental.pallas import tpu as pltpu

EPS = 1e-5


# --------------------------------------------------------------------------- #
# Pallas kernel: fused SBlock (conv1 + ReLU + conv2 + residual + ReLU)         #
# --------------------------------------------------------------------------- #
def make_sblock_kernel(H, W, C, has_xv):
    HW = H * W
    OFF = W + 1                      # interior start lane in padded scratch
    PADLEN = (H + 2) * W + 2         # [W+1 zeros][H*W data][W+1 zeros]
    assert PADLEN == OFF + HW + OFF

    def kernel(*refs):
        if has_xv:
            (x_ref, xv_ref, w1_ref, b1_ref, w2_ref, b2_ref,
             o_ref, pad_ref) = refs
        else:
            (x_ref, w1_ref, b1_ref, w2_ref, b2_ref,
             o_ref, pad_ref) = refs
            xv_ref = None

        # Column masks: a flat lane shift of +-1 (the kw = 0 / 2 taps) would
        # wrap across row boundaries; zero the wrapped column instead.
        if W & (W - 1) == 0:
            col = jax.lax.broadcasted_iota(jnp.int32, (1, HW), 1) & (W - 1)
        else:
            col = jax.lax.broadcasted_iota(jnp.int32, (1, HW), 1) % W
        keep_l = col != 0            # valid lanes for kw == 0 (dw = -1)
        keep_r = col != (W - 1)      # valid lanes for kw == 2 (dw = +1)
        zero_bf = jnp.zeros((), jnp.bfloat16)

        # Zero only the two halo strips; the interior is fully overwritten by
        # each conv below.  Done every grid step so it is per-core correct
        # under megacore "parallel" grids (each TC owns its own scratch).
        pad_ref[:, pl.ds(0, OFF)] = jnp.zeros((C, OFF), jnp.bfloat16)
        pad_ref[:, pl.ds(OFF + HW, OFF)] = jnp.zeros((C, OFF), jnp.bfloat16)

        def conv3x3(v, w_ref, b_ref):
            # v: (C, HW) f32.  Folded conv3x3 + BN, returns (C, HW) f32.
            # Taps are lane-slices of the zero-haloed scratch; the padded
            # tensor is never materialised in vregs.
            pad_ref[:, pl.ds(OFF, HW)] = v.astype(jnp.bfloat16)
            acc = jnp.broadcast_to(b_ref[...], (C, HW))          # f32 bias init
            for kh in range(3):
                for kw in range(3):
                    t = kh * 3 + kw
                    tap = pad_ref[:, pl.ds(kh * W + kw, HW)]     # (C, HW) bf16
                    if kw == 0:
                        tap = jnp.where(keep_l, tap, zero_bf)
                    elif kw == 2:
                        tap = jnp.where(keep_r, tap, zero_bf)
                    acc = acc + jnp.dot(w_ref[t], tap,
                                        preferred_element_type=jnp.float32)
            return acc                                           # (C, HW) f32

        x = x_ref[0]                                             # (C, HW) f32
        if xv_ref is not None:
            x = x + xv_ref[0]

        y = jnp.maximum(conv3x3(x, w1_ref, b1_ref), 0.0)         # ConvBN + relu
        z = conv3x3(y, w2_ref, b2_ref)                           # ConvBN, no act
        o_ref[0] = jnp.maximum(z + x, 0.0)                       # +residual, relu

    return kernel


def sblock_flat(x, params, H, W, xv=None):
    """x, xv: (N, C, H*W) f32 channel-major.  params: folded-BN weights."""
    N, C, HW = x.shape
    has_xv = xv is not None
    kernel = make_sblock_kernel(H, W, C, has_xv)

    img_spec = pl.BlockSpec((1, C, HW), lambda n: (n, 0, 0))
    w_spec = pl.BlockSpec((9, C, C), lambda n: (0, 0, 0))
    b_spec = pl.BlockSpec((C, 1), lambda n: (0, 0))

    in_specs = [img_spec]
    args = [x]
    if has_xv:
        in_specs.append(img_spec)
        args.append(xv)
    for name in ('conv1', 'conv2'):
        in_specs += [w_spec, b_spec]
        args += [params[name]['w'], params[name]['b']]

    return pl.pallas_call(
        kernel,
        out_shape=jax.ShapeDtypeStruct((N, C, HW), jnp.float32),
        grid=(N,),
        in_specs=in_specs,
        out_specs=img_spec,
        scratch_shapes=[pltpu.VMEM((C, (H + 2) * W + 2), jnp.bfloat16)],
        compiler_params=pltpu.CompilerParams(
            dimension_semantics=("parallel",),
            vmem_limit_bytes=32 * 1024 * 1024),
    )(*args)


def sblock(x_l, params, x_v=None):
    """NCHW in / NCHW out, matching the PyTorch module.  Only reshapes
    (free), no NCHW<->NHWC transposes."""
    N, C, H, W = x_l.shape
    x = x_l.reshape(N, C, H * W)
    xv = None if x_v is None else x_v.reshape(N, C, H * W)
    out = sblock_flat(x, params, H, W, xv)
    return out.reshape(N, C, H, W)


# --------------------------------------------------------------------------- #
# Deterministic parameter init (BN folded into conv; raw kept for reference)   #
# --------------------------------------------------------------------------- #
def init_conv_bn(key, cin, cout):
    k = jax.random.split(key, 5)
    w = jax.random.normal(k[0], (cout, cin, 3, 3), jnp.float32) * 0.05
    gamma = 1.0 + 0.1 * jax.random.normal(k[1], (cout,), jnp.float32)
    beta = 0.1 * jax.random.normal(k[2], (cout,), jnp.float32)
    mean = 0.1 * jax.random.normal(k[3], (cout,), jnp.float32)
    var = 0.5 + jax.nn.softplus(jax.random.normal(k[4], (cout,), jnp.float32))
    s = gamma / jnp.sqrt(var + EPS)
    # (cout, cin, kh, kw) * s  ->  (kh, kw, cout, cin)  ->  (9, cout, cin)
    w_folded = jnp.transpose(w * s[:, None, None, None],
                             (2, 3, 0, 1)).reshape(9, cout, cin)
    b_folded = (beta - mean * s).reshape(cout, 1)
    return dict(w=w_folded.astype(jnp.bfloat16),
                b=b_folded,
                raw=dict(w=w, gamma=gamma, beta=beta, mean=mean, var=var))


def init_sblock(key, ch):
    k1, k2 = jax.random.split(key)
    return dict(conv1=init_conv_bn(k1, ch, ch), conv2=init_conv_bn(k2, ch, ch))


# --------------------------------------------------------------------------- #
# Pure-numpy reference (PyTorch semantics, NCHW, eval-mode BN)                 #
# --------------------------------------------------------------------------- #
def np_conv3x3(x, w):
    N, Cin, H, W = x.shape
    Cout = w.shape[0]
    xp = np.pad(x, ((0, 0), (0, 0), (1, 1), (1, 1)))
    out = np.zeros((N, Cout, H, W), np.float32)
    for kh in range(3):
        for kw in range(3):
            patch = xp[:, :, kh:kh + H, kw:kw + W]
            out += np.einsum('nchw,oc->nohw', patch, w[:, :, kh, kw])
    return out


def np_bn(x, raw):
    g, b, m, v = raw['gamma'], raw['beta'], raw['mean'], raw['var']
    return g[None, :, None, None] * (x - m[None, :, None, None]) / \
        np.sqrt(v[None, :, None, None] + EPS) + b[None, :, None, None]


def np_sblock(x_l, p, x_v=0.0):
    x = x_l + x_v
    y = np.maximum(np_bn(np_conv3x3(x, p['conv1']['raw']['w']),
                         p['conv1']['raw']), 0.0)
    z = np_bn(np_conv3x3(y, p['conv2']['raw']['w']), p['conv2']['raw'])
    return np.maximum(z + x, 0.0)


# --------------------------------------------------------------------------- #
if __name__ == "__main__":
    key = jax.random.PRNGKey(0)
    kp, kx, kv = jax.random.split(key, 3)

    N, C, H, W = 2, 32, 16, 16
    x_l = jax.random.normal(kx, (N, C, H, W), jnp.float32)
    x_v = jax.random.normal(kv, (N, C, H, W), jnp.float32)
    params = init_sblock(kp, C)

    # with the optional second input (decoder usage) ...
    out_xv = jax.block_until_ready(jax.jit(sblock)(x_l, params, x_v))
    # ... and with the module default x_v = 0.0
    out_solo = jax.block_until_ready(
        jax.jit(lambda a, p: sblock(a, p))(x_l, params))

    params_np = jax.tree_util.tree_map(np.asarray, params)
    ref_xv = np_sblock(np.asarray(x_l), params_np, np.asarray(x_v))
    ref_solo = np_sblock(np.asarray(x_l), params_np, 0.0)

    def rel_err(a, b):
        return np.max(np.abs(np.asarray(a) - b)) / (np.max(np.abs(b)) + 1e-6)

    assert out_xv.shape == ref_xv.shape == (N, C, H, W)
    assert out_solo.shape == ref_solo.shape == (N, C, H, W)
    e1, e2 = rel_err(out_xv, ref_xv), rel_err(out_solo, ref_solo)
    # bf16 MXU operands with f32 accumulation -> allow 1e-2 relative error.
    assert e1 < 1e-2, f"mismatch (with x_v): rel_err={e1}"
    assert e2 < 1e-2, f"mismatch (x_v=0):   rel_err={e2}"

    print("KERNEL_OK")
</pallas_src>

<mosaic_0001>
module attributes {stable_mosaic.version = 11 : i64} {
  func.func @kernel(%arg0: i32, %arg1: memref<1x32x256xf32, #tpu.memory_space<vmem>>, %arg2: memref<1x32x256xf32, #tpu.memory_space<vmem>>, %arg3: memref<9x32x32xbf16, #tpu.memory_space<vmem>>, %arg4: memref<32x1xf32, #tpu.memory_space<vmem>>, %arg5: memref<9x32x32xbf16, #tpu.memory_space<vmem>>, %arg6: memref<32x1xf32, #tpu.memory_space<vmem>>, %arg7: memref<1x32x256xf32, #tpu.memory_space<vmem>>, %arg8: memref<32x290xbf16, #tpu.memory_space<vmem>>) attributes {dimension_semantics = [#tpu.dimension_semantics<parallel>], iteration_bounds = array<i64: 2>, scalar_prefetch = 0 : i64, scratch_operands = 1 : i64, tpu.core_type = #tpu.core_type<tc>, window_params = [{transform_indices = @transform_0, window_bounds = array<i64: 1, 32, 256>}, {transform_indices = @transform_1, window_bounds = array<i64: 1, 32, 256>}, {pipeline_mode = #tpu.pipeline_mode<synchronous>, transform_indices = @transform_2, window_bounds = array<i64: 9, 32, 32>}, {pipeline_mode = #tpu.pipeline_mode<synchronous>, transform_indices = @transform_3, window_bounds = array<i64: 32, 1>}, {pipeline_mode = #tpu.pipeline_mode<synchronous>, transform_indices = @transform_4, window_bounds = array<i64: 9, 32, 32>}, {pipeline_mode = #tpu.pipeline_mode<synchronous>, transform_indices = @transform_5, window_bounds = array<i64: 32, 1>}, {transform_indices = @transform_6, window_bounds = array<i64: 1, 32, 256>}]} {
    %0 = tpu.iota {dimensions = array<i32: 1>} : vector<1x256xi32>
    %c15_i32 = arith.constant 15 : i32
    %1 = vector.broadcast %c15_i32 : i32 to vector<1x256xi32>
    %2 = arith.andi %0, %1 : vector<1x256xi32>
    %c0_i32 = arith.constant 0 : i32
    %3 = vector.broadcast %c0_i32 : i32 to vector<1x256xi32>
    %4 = arith.cmpi ne, %2, %3 : vector<1x256xi32>
    %c15_i32_0 = arith.constant 15 : i32
    %5 = vector.broadcast %c15_i32_0 : i32 to vector<1x256xi32>
    %6 = arith.cmpi ne, %2, %5 : vector<1x256xi32>
    %cst = arith.constant 0.000000e+00 : bf16
    %7 = vector.broadcast %cst : bf16 to vector<32x17xbf16>
    %c0 = arith.constant 0 : index
    %c0_1 = arith.constant 0 : index
    %8 = vector.load %arg8[%c0, %c0_1] : memref<32x290xbf16, #tpu.memory_space<vmem>>, vector<32x17xbf16>
    tpu.vector_store %arg8[%c0, %c0_1], %7 {strides = array<i32>} : memref<32x290xbf16, #tpu.memory_space<vmem>>, vector<32x17xbf16>,
    %cst_2 = arith.constant 0.000000e+00 : bf16
    %9 = vector.broadcast %cst_2 : bf16 to vector<32x17xbf16>
    %c0_3 = arith.constant 0 : index
    %c273 = arith.constant 273 : index
    %10 = vector.load %arg8[%c0_3, %c273] : memref<32x290xbf16, #tpu.memory_space<vmem>>, vector<32x17xbf16>
    tpu.vector_store %arg8[%c0_3, %c273], %9 {strides = array<i32>} : memref<32x290xbf16, #tpu.memory_space<vmem>>, vector<32x17xbf16>,
    %c0_4 = arith.constant 0 : index
    %c0_5 = arith.constant 0 : index
    %c0_6 = arith.constant 0 : index
    %11 = vector.load %arg1[%c0_4, %c0_5, %c0_6] : memref<1x32x256xf32, #tpu.memory_space<vmem>>, vector<1x32x256xf32>
    %12 = vector.shape_cast %11 : vector<1x32x256xf32> to vector<32x256xf32>
    %c0_7 = arith.constant 0 : index
    %c0_8 = arith.constant 0 : index
    %c0_9 = arith.constant 0 : index
    %13 = vector.load %arg2[%c0_7, %c0_8, %c0_9] : memref<1x32x256xf32, #tpu.memory_space<vmem>>, vector<1x32x256xf32>
    %14 = vector.shape_cast %13 : vector<1x32x256xf32> to vector<32x256xf32>
    %15 = arith.addf %12, %14 : vector<32x256xf32>
    %16 = arith.truncf %15 : vector<32x256xf32> to vector<32x256xbf16>
    %c0_10 = arith.constant 0 : index
    %c17 = arith.constant 17 : index
    %17 = vector.load %arg8[%c0_10, %c17] : memref<32x290xbf16, #tpu.memory_space<vmem>>, vector<32x256xbf16>
    tpu.vector_store %arg8[%c0_10, %c17], %16 {strides = array<i32>} : memref<32x290xbf16, #tpu.memory_space<vmem>>, vector<32x256xbf16>,
    %c0_11 = arith.constant 0 : index
    %c0_12 = arith.constant 0 : index
    %18 = vector.load %arg4[%c0_11, %c0_12] : memref<32x1xf32, #tpu.memory_space<vmem>>, vector<32x1xf32>
    %19 = vector.shape_cast %18 : vector<32x1xf32> to vector<32x1xf32>
    %20 = vector.broadcast %19 : vector<32x1xf32> to vector<32x256xf32>
    %c0_13 = arith.constant 0 : index
    %c0_14 = arith.constant 0 : index
    %21 = vector.load %arg8[%c0_13, %c0_14] : memref<32x290xbf16, #tpu.memory_space<vmem>>, vector<32x256xbf16>
    %cst_15 = arith.constant 0.000000e+00 : bf16
    %22 = vector.shape_cast %4 : vector<1x256xi1> to vector<1x256xi1>
    %23 = vector.broadcast %22 : vector<1x256xi1> to vector<32x256xi1>
    %24 = vector.broadcast %cst_15 : bf16 to vector<32x256xbf16>
    %25 = arith.select %23, %21, %24 : vector<32x256xi1>, vector<32x256xbf16>
    %c0_16 = arith.constant 0 : index
    %c0_17 = arith.constant 0 : index
    %c0_18 = arith.constant 0 : index
    %26 = vector.load %arg3[%c0_16, %c0_17, %c0_18] : memref<9x32x32xbf16, #tpu.memory_space<vmem>>, vector<1x32x32xbf16>
    %27 = vector.shape_cast %26 : vector<1x32x32xbf16> to vector<32x32xbf16>
    %cst_19 = arith.constant dense<0.000000e+00> : vector<32x256xf32>
    %28 = tpu.matmul %27, %25, %cst_19 {dimension_numbers = #tpu.dot_dimension_numbers<[1], [0], [0], [1], [0, 0, 1, 1], [], []>} : vector<32x32xbf16>, vector<32x256xbf16>, vector<32x256xf32> -> vector<32x256xf32>
    %29 = arith.addf %20, %28 : vector<32x256xf32>
    %c0_20 = arith.constant 0 : index
    %c1 = arith.constant 1 : index
    %30 = vector.load %arg8[%c0_20, %c1] : memref<32x290xbf16, #tpu.memory_space<vmem>>, vector<32x256xbf16>
    %c1_21 = arith.constant 1 : index
    %c0_22 = arith.constant 0 : index
    %c0_23 = arith.constant 0 : index
    %31 = vector.load %arg3[%c1_21, %c0_22, %c0_23] : memref<9x32x32xbf16, #tpu.memory_space<vmem>>, vector<1x32x32xbf16>
    %32 = vector.shape_cast %31 : vector<1x32x32xbf16> to vector<32x32xbf16>
    %cst_24 = arith.constant dense<0.000000e+00> : vector<32x256xf32>
    %33 = tpu.matmul %32, %30, %cst_24 {dimension_numbers = #tpu.dot_dimension_numbers<[1], [0], [0], [1], [0, 0, 1, 1], [], []>} : vector<32x32xbf16>, vector<32x256xbf16>, vector<32x256xf32> -> vector<32x256xf32>
    %34 = arith.addf %29, %33 : vector<32x256xf32>
    %c0_25 = arith.constant 0 : index
    %c2 = arith.constant 2 : index
    %35 = vector.load %arg8[%c0_25, %c2] : memref<32x290xbf16, #tpu.memory_space<vmem>>, vector<32x256xbf16>
    %cst_26 = arith.constant 0.000000e+00 : bf16
    %36 = vector.shape_cast %6 : vector<1x256xi1> to vector<1x256xi1>
    %37 = vector.broadcast %36 : vector<1x256xi1> to vector<32x256xi1>
    %38 = vector.broadcast %cst_26 : bf16 to vector<32x256xbf16>
    %39 = arith.select %37, %35, %38 : vector<32x256xi1>, vector<32x256xbf16>
    %c2_27 = arith.constant 2 : index
    %c0_28 = arith.constant 0 : index
    %c0_29 = arith.constant 0 : index
    %40 = vector.load %arg3[%c2_27, %c0_28, %c0_29] : memref<9x32x32xbf16, #tpu.memory_space<vmem>>, vector<1x32x32xbf16>
    %41 = vector.shape_cast %40 : vector<1x32x32xbf16> to vector<32x32xbf16>
    %cst_30 = arith.constant dense<0.000000e+00> : vector<32x256xf32>
    %42 = tpu.matmul %41, %39, %cst_30 {dimension_numbers = #tpu.dot_dimension_numbers<[1], [0], [0], [1], [0, 0, 1, 1], [], []>} : vector<32x32xbf16>, vector<32x256xbf16>, vector<32x256xf32> -> vector<32x256xf32>
    %43 = arith.addf %34, %42 : vector<32x256xf32>
    %c0_31 = arith.constant 0 : index
    %c16 = arith.constant 16 : index
    %44 = vector.load %arg8[%c0_31, %c16] : memref<32x290xbf16, #tpu.memory_space<vmem>>, vector<32x256xbf16>
    %cst_32 = arith.constant 0.000000e+00 : bf16
    %45 = vector.shape_cast %4 : vector<1x256xi1> to vector<1x256xi1>
    %46 = vector.broadcast %45 : vector<1x256xi1> to vector<32x256xi1>
    %47 = vector.broadcast %cst_32 : bf16 to vector<32x256xbf16>
    %48 = arith.select %46, %44, %47 : vector<32x256xi1>, vector<32x256xbf16>
    %c3 = arith.constant 3 : index
    %c0_33 = arith.constant 0 : index
    %c0_34 = arith.constant 0 : index
    %49 = vector.load %arg3[%c3, %c0_33, %c0_34] : memref<9x32x32xbf16, #tpu.memory_space<vmem>>, vector<1x32x32xbf16>
    %50 = vector.shape_cast %49 : vector<1x32x32xbf16> to vector<32x32xbf16>
    %cst_35 = arith.constant dense<0.000000e+00> : vector<32x256xf32>
    %51 = tpu.matmul %50, %48, %cst_35 {dimension_numbers = #tpu.dot_dimension_numbers<[1], [0], [0], [1], [0, 0, 1, 1], [], []>} : vector<32x32xbf16>, vector<32x256xbf16>, vector<32x256xf32> -> vector<32x256xf32>
    %52 = arith.addf %43, %51 : vector<32x256xf32>
    %c0_36 = arith.constant 0 : index
    %c17_37 = arith.constant 17 : index
    %53 = vector.load %arg8[%c0_36, %c17_37] : memref<32x290xbf16, #tpu.memory_space<vmem>>, vector<32x256xbf16>
    %c4 = arith.constant 4 : index
    %c0_38 = arith.constant 0 : index
    %c0_39 = arith.constant 0 : index
    %54 = vector.load %arg3[%c4, %c0_38, %c0_39] : memref<9x32x32xbf16, #tpu.memory_space<vmem>>, vector<1x32x32xbf16>
    %55 = vector.shape_cast %54 : vector<1x32x32xbf16> to vector<32x32xbf16>
    %cst_40 = arith.constant dense<0.000000e+00> : vector<32x256xf32>
    %56 = tpu.matmul %55, %53, %cst_40 {dimension_numbers = #tpu.dot_dimension_numbers<[1], [0], [0], [1], [0, 0, 1, 1], [], []>} : vector<32x32xbf16>, vector<32x256xbf16>, vector<32x256xf32> -> vector<32x256xf32>
    %57 = arith.addf %52, %56 : vector<32x256xf32>
    %c0_41 = arith.constant 0 : index
    %c18 = arith.constant 18 : index
    %58 = vector.load %arg8[%c0_41, %c18] : memref<32x290xbf16, #tpu.memory_space<vmem>>, vector<32x256xbf16>
    %cst_42 = arith.constant 0.000000e+00 : bf16
    %59 = vector.shape_cast %6 : vector<1x256xi1> to vector<1x256xi1>
    %60 = vector.broadcast %59 : vector<1x256xi1> to vector<32x256xi1>
    %61 = vector.broadcast %cst_42 : bf16 to vector<32x256xbf16>
    %62 = arith.select %60, %58, %61 : vector<32x256xi1>, vector<32x256xbf16>
    %c5 = arith.constant 5 : index
    %c0_43 = arith.constant 0 : index
    %c0_44 = arith.constant 0 : index
    %63 = vector.load %arg3[%c5, %c0_43, %c0_44] : memref<9x32x32xbf16, #tpu.memory_space<vmem>>, vector<1x32x32xbf16>
    %64 = vector.shape_cast %63 : vector<1x32x32xbf16> to vector<32x32xbf16>
    %cst_45 = arith.constant dense<0.000000e+00> : vector<32x256xf32>
    %65 = tpu.matmul %64, %62, %cst_45 {dimension_numbers = #tpu.dot_dimension_numbers<[1], [0], [0], [1], [0, 0, 1, 1], [], []>} : vector<32x32xbf16>, vector<32x256xbf16>, vector<32x256xf32> -> vector<32x256xf32>
    %66 = arith.addf %57, %65 : vector<32x256xf32>
    %c0_46 = arith.constant 0 : index
    %c32 = arith.constant 32 : index
    %67 = vector.load %arg8[%c0_46, %c32] : memref<32x290xbf16, #tpu.memory_space<vmem>>, vector<32x256xbf16>
    %cst_47 = arith.constant 0.000000e+00 : bf16
    %68 = vector.shape_cast %4 : vector<1x256xi1> to vector<1x256xi1>
    %69 = vector.broadcast %68 : vector<1x256xi1> to vector<32x256xi1>
    %70 = vector.broadcast %cst_47 : bf16 to vector<32x256xbf16>
    %71 = arith.select %69, %67, %70 : vector<32x256xi1>, vector<32x256xbf16>
    %c6 = arith.constant 6 : index
    %c0_48 = arith.constant 0 : index
    %c0_49 = arith.constant 0 : index
    %72 = vector.load %arg3[%c6, %c0_48, %c0_49] : memref<9x32x32xbf16, #tpu.memory_space<vmem>>, vector<1x32x32xbf16>
    %73 = vector.shape_cast %72 : vector<1x32x32xbf16> to vector<32x32xbf16>
    %cst_50 = arith.constant dense<0.000000e+00> : vector<32x256xf32>
    %74 = tpu.matmul %73, %71, %cst_50 {dimension_numbers = #tpu.dot_dimension_numbers<[1], [0], [0], [1], [0, 0, 1, 1], [], []>} : vector<32x32xbf16>, vector<32x256xbf16>, vector<32x256xf32> -> vector<32x256xf32>
    %75 = arith.addf %66, %74 : vector<32x256xf32>
    %c0_51 = arith.constant 0 : index
    %c33 = arith.constant 33 : index
    %76 = vector.load %arg8[%c0_51, %c33] : memref<32x290xbf16, #tpu.memory_space<vmem>>, vector<32x256xbf16>
    %c7 = arith.constant 7 : index
    %c0_52 = arith.constant 0 : index
    %c0_53 = arith.constant 0 : index
    %77 = vector.load %arg3[%c7, %c0_52, %c0_53] : memref<9x32x32xbf16, #tpu.memory_space<vmem>>, vector<1x32x32xbf16>
    %78 = vector.shape_cast %77 : vector<1x32x32xbf16> to vector<32x32xbf16>
    %cst_54 = arith.constant dense<0.000000e+00> : vector<32x256xf32>
    %79 = tpu.matmul %78, %76, %cst_54 {dimension_numbers = #tpu.dot_dimension_numbers<[1], [0], [0], [1], [0, 0, 1, 1], [], []>} : vector<32x32xbf16>, vector<32x256xbf16>, vector<32x256xf32> -> vector<32x256xf32>
    %80 = arith.addf %75, %79 : vector<32x256xf32>
    %c0_55 = arith.constant 0 : index
    %c34 = arith.constant 34 : index
    %81 = vector.load %arg8[%c0_55, %c34] : memref<32x290xbf16, #tpu.memory_space<vmem>>, vector<32x256xbf16>
    %cst_56 = arith.constant 0.000000e+00 : bf16
    %82 = vector.shape_cast %6 : vector<1x256xi1> to vector<1x256xi1>
    %83 = vector.broadcast %82 : vector<1x256xi1> to vector<32x256xi1>
    %84 = vector.broadcast %cst_56 : bf16 to vector<32x256xbf16>
    %85 = arith.select %83, %81, %84 : vector<32x256xi1>, vector<32x256xbf16>
    %c8 = arith.constant 8 : index
    %c0_57 = arith.constant 0 : index
    %c0_58 = arith.constant 0 : index
    %86 = vector.load %arg3[%c8, %c0_57, %c0_58] : memref<9x32x32xbf16, #tpu.memory_space<vmem>>, vector<1x32x32xbf16>
    %87 = vector.shape_cast %86 : vector<1x32x32xbf16> to vector<32x32xbf16>
    %cst_59 = arith.constant dense<0.000000e+00> : vector<32x256xf32>
    %88 = tpu.matmul %87, %85, %cst_59 {dimension_numbers = #tpu.dot_dimension_numbers<[1], [0], [0], [1], [0, 0, 1, 1], [], []>} : vector<32x32xbf16>, vector<32x256xbf16>, vector<32x256xf32> -> vector<32x256xf32>
    %89 = arith.addf %80, %88 : vector<32x256xf32>
    %cst_60 = arith.constant 0.000000e+00 : f32
    %90 = vector.broadcast %cst_60 : f32 to vector<32x256xf32>
    %91 = arith.maximumf %89, %90 : vector<32x256xf32>
    %92 = arith.truncf %91 : vector<32x256xf32> to vector<32x256xbf16>
    %c0_61 = arith.constant 0 : index
    %c17_62 = arith.constant 17 : index
    %93 = vector.load %arg8[%c0_61, %c17_62] : memref<32x290xbf16, #tpu.memory_space<vmem>>, vector<32x256xbf16>
    tpu.vector_store %arg8[%c0_61, %c17_62], %92 {strides = array<i32>} : memref<32x290xbf16, #tpu.memory_space<vmem>>, vector<32x256xbf16>,
    %c0_63 = arith.constant 0 : index
    %c0_64 = arith.constant 0 : index
    %94 = vector.load %arg6[%c0_63, %c0_64] : memref<32x1xf32, #tpu.memory_space<vmem>>, vector<32x1xf32>
    %95 = vector.shape_cast %94 : vector<32x1xf32> to vector<32x1xf32>
    %96 = vector.broadcast %95 : vector<32x1xf32> to vector<32x256xf32>
    %c0_65 = arith.constant 0 : index
    %c0_66 = arith.constant 0 : index
    %97 = vector.load %arg8[%c0_65, %c0_66] : memref<32x290xbf16, #tpu.memory_space<vmem>>, vector<32x256xbf16>
    %cst_67 = arith.constant 0.000000e+00 : bf16
    %98 = vector.shape_cast %4 : vector<1x256xi1> to vector<1x256xi1>
    %99 = vector.broadcast %98 : vector<1x256xi1> to vector<32x256xi1>
    %100 = vector.broadcast %cst_67 : bf16 to vector<32x256xbf16>
    %101 = arith.select %99, %97, %100 : vector<32x256xi1>, vector<32x256xbf16>
    %c0_68 = arith.constant 0 : index
    %c0_69 = arith.constant 0 : index
    %c0_70 = arith.constant 0 : index
    %102 = vector.load %arg5[%c0_68, %c0_69, %c0_70] : memref<9x32x32xbf16, #tpu.memory_space<vmem>>, vector<1x32x32xbf16>
    %103 = vector.shape_cast %102 : vector<1x32x32xbf16> to vector<32x32xbf16>
    %cst_71 = arith.constant dense<0.000000e+00> : vector<32x256xf32>
    %104 = tpu.matmul %103, %101, %cst_71 {dimension_numbers = #tpu.dot_dimension_numbers<[1], [0], [0], [1], [0, 0, 1, 1], [], []>} : vector<32x32xbf16>, vector<32x256xbf16>, vector<32x256xf32> -> vector<32x256xf32>
    %105 = arith.addf %96, %104 : vector<32x256xf32>
    %c0_72 = arith.constant 0 : index
    %c1_73 = arith.constant 1 : index
    %106 = vector.load %arg8[%c0_72, %c1_73] : memref<32x290xbf16, #tpu.memory_space<vmem>>, vector<32x256xbf16>
    %c1_74 = arith.constant 1 : index
    %c0_75 = arith.constant 0 : index
    %c0_76 = arith.constant 0 : index
    %107 = vector.load %arg5[%c1_74, %c0_75, %c0_76] : memref<9x32x32xbf16, #tpu.memory_space<vmem>>, vector<1x32x32xbf16>
    %108 = vector.shape_cast %107 : vector<1x32x32xbf16> to vector<32x32xbf16>
    %cst_77 = arith.constant dense<0.000000e+00> : vector<32x256xf32>
    %109 = tpu.matmul %108, %106, %cst_77 {dimension_numbers = #tpu.dot_dimension_numbers<[1], [0], [0], [1], [0, 0, 1, 1], [], []>} : vector<32x32xbf16>, vector<32x256xbf16>, vector<32x256xf32> -> vector<32x256xf32>
    %110 = arith.addf %105, %109 : vector<32x256xf32>
    %c0_78 = arith.constant 0 : index
    %c2_79 = arith.constant 2 : index
    %111 = vector.load %arg8[%c0_78, %c2_79] : memref<32x290xbf16, #tpu.memory_space<vmem>>, vector<32x256xbf16>
    %cst_80 = arith.constant 0.000000e+00 : bf16
    %112 = vector.shape_cast %6 : vector<1x256xi1> to vector<1x256xi1>
    %113 = vector.broadcast %112 : vector<1x256xi1> to vector<32x256xi1>
    %114 = vector.broadcast %cst_80 : bf16 to vector<32x256xbf16>
    %115 = arith.select %113, %111, %114 : vector<32x256xi1>, vector<32x256xbf16>
    %c2_81 = arith.constant 2 : index
    %c0_82 = arith.constant 0 : index
    %c0_83 = arith.constant 0 : index
    %116 = vector.load %arg5[%c2_81, %c0_82, %c0_83] : memref<9x32x32xbf16, #tpu.memory_space<vmem>>, vector<1x32x32xbf16>
    %117 = vector.shape_cast %116 : vector<1x32x32xbf16> to vector<32x32xbf16>
    %cst_84 = arith.constant dense<0.000000e+00> : vector<32x256xf32>
    %118 = tpu.matmul %117, %115, %cst_84 {dimension_numbers = #tpu.dot_dimension_numbers<[1], [0], [0], [1], [0, 0, 1, 1], [], []>} : vector<32x32xbf16>, vector<32x256xbf16>, vector<32x256xf32> -> vector<32x256xf32>
    %119 = arith.addf %110, %118 : vector<32x256xf32>
    %c0_85 = arith.constant 0 : index
    %c16_86 = arith.constant 16 : index
    %120 = vector.load %arg8[%c0_85, %c16_86] : memref<32x290xbf16, #tpu.memory_space<vmem>>, vector<32x256xbf16>
    %cst_87 = arith.constant 0.000000e+00 : bf16
    %121 = vector.shape_cast %4 : vector<1x256xi1> to vector<1x256xi1>
    %122 = vector.broadcast %121 : vector<1x256xi1> to vector<32x256xi1>
    %123 = vector.broadcast %cst_87 : bf16 to vector<32x256xbf16>
    %124 = arith.select %122, %120, %123 : vector<32x256xi1>, vector<32x256xbf16>
    %c3_88 = arith.constant 3 : index
    %c0_89 = arith.constant 0 : index
    %c0_90 = arith.constant 0 : index
    %125 = vector.load %arg5[%c3_88, %c0_89, %c0_90] : memref<9x32x32xbf16, #tpu.memory_space<vmem>>, vector<1x32x32xbf16>
    %126 = vector.shape_cast %125 : vector<1x32x32xbf16> to vector<32x32xbf16>
    %cst_91 = arith.constant dense<0.000000e+00> : vector<32x256xf32>
    %127 = tpu.matmul %126, %124, %cst_91 {dimension_numbers = #tpu.dot_dimension_numbers<[1], [0], [0], [1], [0, 0, 1, 1], [], []>} : vector<32x32xbf16>, vector<32x256xbf16>, vector<32x256xf32> -> vector<32x256xf32>
    %128 = arith.addf %119, %127 : vector<32x256xf32>
    %c0_92 = arith.constant 0 : index
    %c17_93 = arith.constant 17 : index
    %129 = vector.load %arg8[%c0_92, %c17_93] : memref<32x290xbf16, #tpu.memory_space<vmem>>, vector<32x256xbf16>
    %c4_94 = arith.constant 4 : index
    %c0_95 = arith.constant 0 : index
    %c0_96 = arith.constant 0 : index
    %130 = vector.load %arg5[%c4_94, %c0_95, %c0_96] : memref<9x32x32xbf16, #tpu.memory_space<vmem>>, vector<1x32x32xbf16>
    %131 = vector.shape_cast %130 : vector<1x32x32xbf16> to vector<32x32xbf16>
    %cst_97 = arith.constant dense<0.000000e+00> : vector<32x256xf32>
    %132 = tpu.matmul %131, %129, %cst_97 {dimension_numbers = #tpu.dot_dimension_numbers<[1], [0], [0], [1], [0, 0, 1, 1], [], []>} : vector<32x32xbf16>, vector<32x256xbf16>, vector<32x256xf32> -> vector<32x256xf32>
    %133 = arith.addf %128, %132 : vector<32x256xf32>
    %c0_98 = arith.constant 0 : index
    %c18_99 = arith.constant 18 : index
    %134 = vector.load %arg8[%c0_98, %c18_99] : memref<32x290xbf16, #tpu.memory_space<vmem>>, vector<32x256xbf16>
    %cst_100 = arith.constant 0.000000e+00 : bf16
    %135 = vector.shape_cast %6 : vector<1x256xi1> to vector<1x256xi1>
    %136 = vector.broadcast %135 : vector<1x256xi1> to vector<32x256xi1>
    %137 = vector.broadcast %cst_100 : bf16 to vector<32x256xbf16>
    %138 = arith.select %136, %134, %137 : vector<32x256xi1>, vector<32x256xbf16>
    %c5_101 = arith.constant 5 : index
    %c0_102 = arith.constant 0 : index
    %c0_103 = arith.constant 0 : index
    %139 = vector.load %arg5[%c5_101, %c0_102, %c0_103] : memref<9x32x32xbf16, #tpu.memory_space<vmem>>, vector<1x32x32xbf16>
    %140 = vector.shape_cast %139 : vector<1x32x32xbf16> to vector<32x32xbf16>
    %cst_104 = arith.constant dense<0.000000e+00> : vector<32x256xf32>
    %141 = tpu.matmul %140, %138, %cst_104 {dimension_numbers = #tpu.dot_dimension_numbers<[1], [0], [0], [1], [0, 0, 1, 1], [], []>} : vector<32x32xbf16>, vector<32x256xbf16>, vector<32x256xf32> -> vector<32x256xf32>
    %142 = arith.addf %133, %141 : vector<32x256xf32>
    %c0_105 = arith.constant 0 : index
    %c32_106 = arith.constant 32 : index
    %143 = vector.load %arg8[%c0_105, %c32_106] : memref<32x290xbf16, #tpu.memory_space<vmem>>, vector<32x256xbf16>
    %cst_107 = arith.constant 0.000000e+00 : bf16
    %144 = vector.shape_cast %4 : vector<1x256xi1> to vector<1x256xi1>
    %145 = vector.broadcast %144 : vector<1x256xi1> to vector<32x256xi1>
    %146 = vector.broadcast %cst_107 : bf16 to vector<32x256xbf16>
    %147 = arith.select %145, %143, %146 : vector<32x256xi1>, vector<32x256xbf16>
    %c6_108 = arith.constant 6 : index
    %c0_109 = arith.constant 0 : index
    %c0_110 = arith.constant 0 : index
    %148 = vector.load %arg5[%c6_108, %c0_109, %c0_110] : memref<9x32x32xbf16, #tpu.memory_space<vmem>>, vector<1x32x32xbf16>
    %149 = vector.shape_cast %148 : vector<1x32x32xbf16> to vector<32x32xbf16>
    %cst_111 = arith.constant dense<0.000000e+00> : vector<32x256xf32>
    %150 = tpu.matmul %149, %147, %cst_111 {dimension_numbers = #tpu.dot_dimension_numbers<[1], [0], [0], [1], [0, 0, 1, 1], [], []>} : vector<32x32xbf16>, vector<32x256xbf16>, vector<32x256xf32> -> vector<32x256xf32>
    %151 = arith.addf %142, %150 : vector<32x256xf32>
    %c0_112 = arith.constant 0 : index
    %c33_113 = arith.constant 33 : index
    %152 = vector.load %arg8[%c0_112, %c33_113] : memref<32x290xbf16, #tpu.memory_space<vmem>>, vector<32x256xbf16>
    %c7_114 = arith.constant 7 : index
    %c0_115 = arith.constant 0 : index
    %c0_116 = arith.constant 0 : index
    %153 = vector.load %arg5[%c7_114, %c0_115, %c0_116] : memref<9x32x32xbf16, #tpu.memory_space<vmem>>, vector<1x32x32xbf16>
    %154 = vector.shape_cast %153 : vector<1x32x32xbf16> to vector<32x32xbf16>
    %cst_117 = arith.constant dense<0.000000e+00> : vector<32x256xf32>
    %155 = tpu.matmul %154, %152, %cst_117 {dimension_numbers = #tpu.dot_dimension_numbers<[1], [0], [0], [1], [0, 0, 1, 1], [], []>} : vector<32x32xbf16>, vector<32x256xbf16>, vector<32x256xf32> -> vector<32x256xf32>
    %156 = arith.addf %151, %155 : vector<32x256xf32>
    %c0_118 = arith.constant 0 : index
    %c34_119 = arith.constant 34 : index
    %157 = vector.load %arg8[%c0_118, %c34_119] : memref<32x290xbf16, #tpu.memory_space<vmem>>, vector<32x256xbf16>
    %cst_120 = arith.constant 0.000000e+00 : bf16
    %158 = vector.shape_cast %6 : vector<1x256xi1> to vector<1x256xi1>
    %159 = vector.broadcast %158 : vector<1x256xi1> to vector<32x256xi1>
    %160 = vector.broadcast %cst_120 : bf16 to vector<32x256xbf16>
    %161 = arith.select %159, %157, %160 : vector<32x256xi1>, vector<32x256xbf16>
    %c8_121 = arith.constant 8 : index
    %c0_122 = arith.constant 0 : index
    %c0_123 = arith.constant 0 : index
    %162 = vector.load %arg5[%c8_121, %c0_122, %c0_123] : memref<9x32x32xbf16, #tpu.memory_space<vmem>>, vector<1x32x32xbf16>
    %163 = vector.shape_cast %162 : vector<1x32x32xbf16> to vector<32x32xbf16>
    %cst_124 = arith.constant dense<0.000000e+00> : vector<32x256xf32>
    %164 = tpu.matmul %163, %161, %cst_124 {dimension_numbers = #tpu.dot_dimension_numbers<[1], [0], [0], [1], [0, 0, 1, 1], [], []>} : vector<32x32xbf16>, vector<32x256xbf16>, vector<32x256xf32> -> vector<32x256xf32>
    %165 = arith.addf %156, %164 : vector<32x256xf32>
    %166 = arith.addf %165, %15 : vector<32x256xf32>
    %cst_125 = arith.constant 0.000000e+00 : f32
    %167 = vector.broadcast %cst_125 : f32 to vector<32x256xf32>
    %168 = arith.maximumf %166, %167 : vector<32x256xf32>
    %c0_126 = arith.constant 0 : index
    %c0_127 = arith.constant 0 : index
    %c0_128 = arith.constant 0 : index
    %169 = vector.load %arg7[%c0_126, %c0_127, %c0_128] : memref<1x32x256xf32, #tpu.memory_space<vmem>>, vector<1x32x256xf32>
    %170 = vector.shape_cast %169 : vector<1x32x256xf32> to vector<32x256xf32>
    %171 = vector.shape_cast %168 : vector<32x256xf32> to vector<1x32x256xf32>
    tpu.vector_store %arg7[%c0_126, %c0_127, %c0_128], %171 {strides = array<i32>} : memref<1x32x256xf32, #tpu.memory_space<vmem>>, vector<1x32x256xf32>,
    return
  }
  func.func @transform_0(%arg0: i32) -> (i32, i32, i32) {
    %c0_i32 = arith.constant 0 : i32
    %c0_i32_0 = arith.constant 0 : i32
    %c0_i32_1 = arith.constant 0 : i32
    return %arg0, %c0_i32, %c0_i32_0 : i32, i32, i32
  }
  func.func @transform_1(%arg0: i32) -> (i32, i32, i32) {
    %c0_i32 = arith.constant 0 : i32
    %c0_i32_0 = arith.constant 0 : i32
    %c0_i32_1 = arith.constant 0 : i32
    return %arg0, %c0_i32, %c0_i32_0 : i32, i32, i32
  }
  func.func @transform_2(%arg0: i32) -> (i32, i32, i32) {
    %c0_i32 = arith.constant 0 : i32
    %c0_i32_0 = arith.constant 0 : i32
    %c0_i32_1 = arith.constant 0 : i32
    %c0_i32_2 = arith.constant 0 : i32
    return %c0_i32, %c0_i32_0, %c0_i32_1 : i32, i32, i32
  }
  func.func @transform_3(%arg0: i32) -> (i32, i32) {
    %c0_i32 = arith.constant 0 : i32
    %c0_i32_0 = arith.constant 0 : i32
    %c0_i32_1 = arith.constant 0 : i32
    return %c0_i32, %c0_i32_0 : i32, i32
  }
  func.func @transform_4(%arg0: i32) -> (i32, i32, i32) {
    %c0_i32 = arith.constant 0 : i32
    %c0_i32_0 = arith.constant 0 : i32
    %c0_i32_1 = arith.constant 0 : i32
    %c0_i32_2 = arith.constant 0 : i32
    return %c0_i32, %c0_i32_0, %c0_i32_1 : i32, i32, i32
  }
  func.func @transform_5(%arg0: i32) -> (i32, i32) {
    %c0_i32 = arith.constant 0 : i32
    %c0_i32_0 = arith.constant 0 : i32
    %c0_i32_1 = arith.constant 0 : i32
    return %c0_i32, %c0_i32_0 : i32, i32
  }
  func.func @transform_6(%arg0: i32) -> (i32, i32, i32) {
    %c0_i32 = arith.constant 0 : i32
    %c0_i32_0 = arith.constant 0 : i32
    %c0_i32_1 = arith.constant 0 : i32
    return %arg0, %c0_i32, %c0_i32_0 : i32, i32, i32
  }
}

</mosaic_0001>

<llo_original>
// kernel: sblock.1
$region0: #{sblock.1}
  #allocation0 [shape = 'u32[]', space=smem, size = 0x4, offset = 0x4, fixed_abs, tag = 'smem constant byte address 0x4 - core index']
  #allocation1 [shape = 'u32[72,128]{1,0:T(1,128)}', space=vmem, size = 0x9000, scoped, tag = 'internal scratch']
  #allocation2 [shape = 'bf16[32,290]{1,0:T(8,128)(2,1)}', space=vmem, size = 0x6000, scoped, tag = 'scratch operand']
  %s0 = inlined_call_operand.vmem [shape: f32[2,32,256], index: 0, kind: input, shape index: {}]
  %s1 = inlined_call_operand.vmem [shape: f32[2,32,256], index: 1, kind: input, shape index: {}]
  %s2 = inlined_call_operand.vmem [shape: bf16[9,32,32], index: 2, kind: input, shape index: {}]
  %s3 = inlined_call_operand.vmem [shape: f32[32,1], index: 3, kind: input, shape index: {}]
  %s4 = inlined_call_operand.vmem [shape: bf16[9,32,32], index: 4, kind: input, shape index: {}]
  %s5 = inlined_call_operand.vmem [shape: f32[32,1], index: 5, kind: input, shape index: {}]
  %s6 = inlined_call_operand.vmem [shape: f32[2,32,256], index: 6, kind: output, shape index: {}]
  %s7 = sld [smem:[#allocation0]]
  $region57: #{sblock.1} parent=0
    _
  %s9 = ssub.s32 1, %s7
  %s10 = scalar_select 0, %s9, %s7
  loop: start=0, step=1, limit=4
  $region2: #{sblock.1} parent=0 // loop_pre_header
    _
  $region3: #{sblock.1} parent=0 // loop_header
    %s12 = sphi 0, %s16
    %p13 = scmp.ge.s32.totalorder %s12, 4
    %s22 = sphi 0, %s24
    %s25 = sphi 0, %s22
    %s26 = sphi 0, %s25
    %s42 = sphi 0, %s26
    %s48 = sphi 0, %s50
    %s51 = sphi 0, %s48
    %s52 = sphi 0, %s51
    %s68 = sphi 0, %s52
    %s72 = sphi 0, %s72
    %s74 = sphi 0, %s72
    %s75 = sphi 0, %s74
    %s89 = sphi 0, %s75
    %s93 = sphi 0, %s93
    %s95 = sphi 0, %s93
    %s96 = sphi 0, %s95
    %s110 = sphi 0, %s96
    %s114 = sphi 0, %s114
    %s116 = sphi 0, %s114
    %s117 = sphi 0, %s116
    %s131 = sphi 0, %s117
    %s135 = sphi 0, %s135
    %s137 = sphi 0, %s135
    %s138 = sphi 0, %s137
    %s152 = sphi 0, %s138
    %s158 = sphi 0, %s160
    %s161 = sphi 0, %s158
    %s162 = sphi 0, %s161
    %s178 = sphi 0, %s162
  $region4: #{sblock.1} parent=0 // loop_header_branch
    %15 = sbr.rel (%p13) target = $region8
  $region5: #{sblock.1} parent=0 // loop_body
    %s17 = ssub.s32 %s12, 1
    %s18 = ssub.s32 %s12, 2
    %s19 = sadd.s32 %s12, 1
    %s20 = ssub.s32 %s12, %s19
    %p21 = scmp.eq.s32.totalorder %s20, 0
    %s23 = sadd.s32 %s22, 1
    %s24 = scalar_select %p21, %s22, %s23
    %p27 = pneg %p21
    %p28 = scmp.eq.s32.totalorder %s12, 1
    %p29 = por %p27, %p28
    %p30 = scmp.ne.s32.totalorder %s22, %s25
    %p31 = scmp.eq.s32.totalorder %s12, 0
    %p32 = por %p30, %p31
    %p33 = scmp.ne.s32.totalorder %s22, %s25
    %p34 = scmp.eq.s32.totalorder %s17, 1
    %p35 = por %p33, %p34
    %p36 = scmp.ne.s32.totalorder %s25, %s26
    %p37 = scmp.eq.s32.totalorder %s17, 0
    %p38 = por %p36, %p37
    %p39 = scmp.ne.s32.totalorder %s25, %s26
    %p40 = scmp.eq.s32.totalorder %s18, 1
    %p41 = por %p39, %p40
    %p43 = scmp.ne.s32.totalorder %s26, %s42
    %p44 = scmp.eq.s32.totalorder %s18, 0
    %p45 = por %p43, %p44
    %s46 = ssub.s32 %s12, %s19
    %p47 = scmp.eq.s32.totalorder %s46, 0
    %s49 = sadd.s32 %s48, 1
    %s50 = scalar_select %p47, %s48, %s49
    %p53 = pneg %p47
    %p54 = scmp.eq.s32.totalorder %s12, 1
    %p55 = por %p53, %p54
    %p56 = scmp.ne.s32.totalorder %s48, %s51
    %p57 = scmp.eq.s32.totalorder %s12, 0
    %p58 = por %p56, %p57
    %p59 = scmp.ne.s32.totalorder %s48, %s51
    %p60 = scmp.eq.s32.totalorder %s17, 1
    %p61 = por %p59, %p60
    %p62 = scmp.ne.s32.totalorder %s51, %s52
    %p63 = scmp.eq.s32.totalorder %s17, 0
    %p64 = por %p62, %p63
    %p65 = scmp.ne.s32.totalorder %s51, %s52
    %p66 = scmp.eq.s32.totalorder %s18, 1
    %p67 = por %p65, %p66
    %p69 = scmp.ne.s32.totalorder %s52, %s68
    %p70 = scmp.eq.s32.totalorder %s18, 0
    %p71 = por %p69, %p70
    %s73 = sadd.s32 %s72, 1
    %p76 = scmp.eq.s32.totalorder %s12, 1
    %p77 = scmp.ne.s32.totalorder %s72, %s74
    %p78 = scmp.eq.s32.totalorder %s12, 0
    %p79 = por %p77, %p78
    %p80 = scmp.ne.s32.totalorder %s72, %s74
    %p81 = scmp.eq.s32.totalorder %s17, 1
    %p82 = por %p80, %p81
    %p83 = scmp.ne.s32.totalorder %s74, %s75
    %p84 = scmp.eq.s32.totalorder %s17, 0
    %p85 = por %p83, %p84
    %p86 = scmp.ne.s32.totalorder %s74, %s75
    %p87 = scmp.eq.s32.totalorder %s18, 1
    %p88 = por %p86, %p87
    %p90 = scmp.ne.s32.totalorder %s75, %s89
    %p91 = scmp.eq.s32.totalorder %s18, 0
    %p92 = por %p90, %p91
    %s94 = sadd.s32 %s93, 1
    %p97 = scmp.eq.s32.totalorder %s12, 1
    %p98 = scmp.ne.s32.totalorder %s93, %s95
    %p99 = scmp.eq.s32.totalorder %s12, 0
    %p100 = por %p98, %p99
    %p101 = scmp.ne.s32.totalorder %s93, %s95
    %p102 = scmp.eq.s32.totalorder %s17, 1
    %p103 = por %p101, %p102
    %p104 = scmp.ne.s32.totalorder %s95, %s96
    %p105 = scmp.eq.s32.totalorder %s17, 0
    %p106 = por %p104, %p105
    %p107 = scmp.ne.s32.totalorder %s95, %s96
    %p108 = scmp.eq.s32.totalorder %s18, 1
    %p109 = por %p107, %p108
    %p111 = scmp.ne.s32.totalorder %s96, %s110
    %p112 = scmp.eq.s32.totalorder %s18, 0
    %p113 = por %p111, %p112
    %s115 = sadd.s32 %s114, 1
    %p118 = scmp.eq.s32.totalorder %s12, 1
    %p119 = scmp.ne.s32.totalorder %s114, %s116
    %p120 = scmp.eq.s32.totalorder %s12, 0
    %p121 = por %p119, %p120
    %p122 = scmp.ne.s32.totalorder %s114, %s116
    %p123 = scmp.eq.s32.totalorder %s17, 1
    %p124 = por %p122, %p123
    %p125 = scmp.ne.s32.totalorder %s116, %s117
    %p126 = scmp.eq.s32.totalorder %s17, 0
    %p127 = por %p125, %p126
    %p128 = scmp.ne.s32.totalorder %s116, %s117
    %p129 = scmp.eq.s32.totalorder %s18, 1
    %p130 = por %p128, %p129
    %p132 = scmp.ne.s32.totalorder %s117, %s131
    %p133 = scmp.eq.s32.totalorder %s18, 0
    %p134 = por %p132, %p133
    %s136 = sadd.s32 %s135, 1
    %p139 = scmp.eq.s32.totalorder %s12, 1
    %p140 = scmp.ne.s32.totalorder %s135, %s137
    %p141 = scmp.eq.s32.totalorder %s12, 0
    %p142 = por %p140, %p141
    %p143 = scmp.ne.s32.totalorder %s135, %s137
    %p144 = scmp.eq.s32.totalorder %s17, 1
    %p145 = por %p143, %p144
    %p146 = scmp.ne.s32.totalorder %s137, %s138
    %p147 = scmp.eq.s32.totalorder %s17, 0
    %p148 = por %p146, %p147
    %p149 = scmp.ne.s32.totalorder %s137, %s138
    %p150 = scmp.eq.s32.totalorder %s18, 1
    %p151 = por %p149, %p150
    %p153 = scmp.ne.s32.totalorder %s138, %s152
    %p154 = scmp.eq.s32.totalorder %s18, 0
    %p155 = por %p153, %p154
    %s156 = ssub.s32 %s12, %s19
    %p157 = scmp.eq.s32.totalorder %s156, 0
    %s159 = sadd.s32 %s158, 1
    %s160 = scalar_select %p157, %s158, %s159
    %p163 = pneg %p157
    %p164 = scmp.eq.s32.totalorder %s12, 1
    %p165 = por %p163, %p164
    %p166 = scmp.ne.s32.totalorder %s158, %s161
    %p167 = scmp.eq.s32.totalorder %s12, 0
    %p168 = por %p166, %p167
    %p169 = scmp.ne.s32.totalorder %s158, %s161
    %p170 = scmp.eq.s32.totalorder %s17, 1
    %p171 = por %p169, %p170
    %p172 = scmp.ne.s32.totalorder %s161, %s162
    %p173 = scmp.eq.s32.totalorder %s17, 0
    %p174 = por %p172, %p173
    %p175 = scmp.ne.s32.totalorder %s161, %s162
    %p176 = scmp.eq.s32.totalorder %s18, 1
    %p177 = por %p175, %p176
    %p179 = scmp.ne.s32.totalorder %s162, %s178
    %p180 = scmp.eq.s32.totalorder %s18, 0
    %p181 = por %p179, %p180
    %p182 = scmp.le.s32.totalorder 1, %s12
    %p183 = scmp.lt.s32.totalorder %s12, 3
    %p184 = pnand %p182, %p183
    %p185 = pneg %p184
    // Predicated region
    $region9: #{sblock.1} parent=5 // pred_check
      _
    $region10: #{sblock.1} parent=5 // pred_check_branch
      %187 = sbr.rel (%p184) target = $region12
    $region11: #{sblock.1} parent=5 // pred_region
      %s188 = ssub.s32 %s12, 1
      // Predicated region
      $region13: #{sblock.1} parent=11 // pred_check
        %p189 = pneg %p85
      $region14: #{sblock.1} parent=11 // pred_check_branch
        %191 = sbr.rel (%p189) target = $region16
      $region15: #{sblock.1} parent=11 // pred_region
        _
      $region16: #{sblock.1} parent=11 // pred_fallthru
        _
      // Predicated region
      $region17: #{sblock.1} parent=11 // pred_check
        %p192 = pneg %p106
      $region18: #{sblock.1} parent=11 // pred_check_branch
        %194 = sbr.rel (%p192) target = $region20
      $region19: #{sblock.1} parent=11 // pred_region
        _
      $region20: #{sblock.1} parent=11 // pred_fallthru
        _
      // Predicated region
      $region21: #{sblock.1} parent=11 // pred_check
        %p195 = pneg %p127
      $region22: #{sblock.1} parent=11 // pred_check_branch
        %197 = sbr.rel (%p195) target = $region24
      $region23: #{sblock.1} parent=11 // pred_region
        _
      $region24: #{sblock.1} parent=11 // pred_fallthru
        _
      // Predicated region
      $region25: #{sblock.1} parent=11 // pred_check
        %p198 = pneg %p148
      $region26: #{sblock.1} parent=11 // pred_check_branch
        %200 = sbr.rel (%p198) target = $region28
      $region27: #{sblock.1} parent=11 // pred_region
        _
      $region28: #{sblock.1} parent=11 // pred_fallthru
        _
    $region12: #{sblock.1} parent=5 // pred_fallthru
      _
    %p201 = scmp.lt.s32.totalorder %s12, 2
    // Predicated region
    $region29: #{sblock.1} parent=5 // pred_check
      %p202 = pneg %p201
    $region30: #{sblock.1} parent=5 // pred_check_branch
      %204 = sbr.rel (%p202) target = $region32
    $region31: #{sblock.1} parent=5 // pred_region
      // Predicated region
      $region33: #{sblock.1} parent=31 // pred_check
        %p205 = pneg %p32
      $region34: #{sblock.1} parent=31 // pred_check_branch
        %207 = sbr.rel (%p205) target = $region36
      $region35: #{sblock.1} parent=31 // pred_region
        %p208 = scmp.lt.s32.totalorder %s12, 1
        %s209 = scalar_select %p208, %s12, 1
        %s210 = smul.addr %s209, 8
        %s211 = smul.addr %s210, 8
        %s212 = scalar_lea.vmem %s0, %s211
      $region36: #{sblock.1} parent=31 // pred_fallthru
        _
      // Predicated region
      $region37: #{sblock.1} parent=31 // pred_check
        %p213 = pneg %p58
      $region38: #{sblock.1} parent=31 // pred_check_branch
        %215 = sbr.rel (%p213) target = $region40
      $region39: #{sblock.1} parent=31 // pred_region
        %p216 = scmp.lt.s32.totalorder %s12, 1
        %s217 = scalar_select %p216, %s12, 1
        %s218 = smul.addr %s217, 8
        %s219 = smul.addr %s218, 8
        %s220 = scalar_lea.vmem %s1, %s219
      $region40: #{sblock.1} parent=31 // pred_fallthru
        _
    $region32: #{sblock.1} parent=5 // pred_fallthru
      _
    %p221 = scmp.le.s32.totalorder 1, %s12
    %p222 = scmp.lt.s32.totalorder %s12, 3
    %p223 = pnand %p221, %p222
    %p224 = pneg %p223
    // Predicated region
    $region41: #{sblock.1} parent=5 // pred_check
      _
    $region42: #{sblock.1} parent=5 // pred_check_branch
      %226 = sbr.rel (%p223) target = $region44
    $region43: #{sblock.1} parent=5 // pred_region
      %s227 = ssub.s32 %s12, 1
      %p228 = scmp.lt.s32.totalorder %s17, 1
      %s229 = scalar_select %p228, %s17, 1
      %s230 = smul.addr %s229, 8
      %s231 = smul.addr %s230, 8
      %s232 = scalar_lea.vmem %s0, %s231
      %p233 = pneg %p38
      %p234 = pneg %p35
      %p235 = scmp.lt.s32.totalorder %s17, 1
      %s236 = scalar_select %p235, %s17, 1
      %s237 = smul.addr %s236, 8
      %s238 = smul.addr %s237, 8
      %s239 = scalar_lea.vmem %s1, %s238
      %p240 = pneg %p64
      %p241 = pneg %p61
      %p242 = pneg %p85
      %p243 = pneg %p82
      %p244 = pneg %p106
      %p245 = pneg %p103
      %p246 = pneg %p127
      %p247 = pneg %p124
      %p248 = pneg %p148
      %p249 = pneg %p145
      %p250 = pneg %p174
      %p251 = pneg %p171
      %p252 = scmp.lt.s32.totalorder %s17, 1
      %s253 = scalar_select %p252, %s17, 1
      %s254 = smul.addr %s253, 8
      %s255 = smul.addr %s254, 8
      %s256 = scalar_lea.vmem %s6, %s255
      %p257 = scmp.lt.s32.totalorder %s17, 1
      %s258 = scalar_select %p257, %s17, 1
      %s259 = smul.addr %s258, 8
      %s260 = smul.addr %s259, 8
      %s261 = scalar_lea.vmem %s0, %s260
      %p262 = scmp.lt.s32.totalorder %s17, 1
      %s263 = scalar_select %p262, %s17, 1
      %s264 = smul.addr %s263, 8
      %s265 = smul.addr %s264, 8
      %s266 = scalar_lea.vmem %s1, %s265
      %p267 = scmp.lt.s32.totalorder %s17, 1
      %s268 = scalar_select %p267, %s17, 1
      %s269 = smul.addr %s268, 8
      %s270 = smul.addr %s269, 8
      %s271 = scalar_lea.vmem %s6, %s270
      %v275 = vlaneseq
      %v276 = vand.u32 %v275, 127
      %v277 = vadd.s32 %v276, 128
      %v278 = vand.u32 %v276, 15
      %v279 = vand.u32 %v277, 15
      %vm280 = vcmp.ne.s32.totalorder %v278, 0
      %vm281 = vcmp.ne.s32.totalorder %v279, 0
      %vm282 = vcmp.ne.s32.totalorder %v278, 15
      %vm283 = vcmp.ne.s32.totalorder %v279, 15
      %vm284 = vcmask 134144
      %285 = vst.msk [vmem:[#allocation2] sm:$0xf] %vm284, 0
      %286 = vst.msk [vmem:[#allocation2 + $0xc] sm:$0xf] %vm284, 0
      %287 = vst.msk [vmem:[#allocation2 + $0x18] sm:$0xf] %vm284, 0
      %288 = vst.msk [vmem:[#allocation2 + $0x24] sm:$0xf] %vm284, 0
      %vm289 = vcmask 273544
      %290 = vst.msk [vmem:[#allocation2 + $0x8] sm:$0xf] %vm289, 0
      %291 = vst.msk [vmem:[#allocation2 + $0x14] sm:$0xf] %vm289, 0
      %292 = vst.msk [vmem:[#allocation2 + $0x20] sm:$0xf] %vm289, 0
      %293 = vst.msk [vmem:[#allocation2 + $0x2c] sm:$0xf] %vm289, 0
      %v294 = vld [vmem:[%s261] sm:$0xff]
      %v295 = vld [vmem:[%s261 + $0x8] sm:$0xff]
      %v296 = vld [vmem:[%s261 + $0x10] sm:$0xff]
      %v297 = vld [vmem:[%s261 + $0x18] sm:$0xff]
      %v298 = vld [vmem:[%s261 + $0x20] sm:$0xff]
      %v299 = vld [vmem:[%s261 + $0x28] sm:$0xff]
      %v300 = vld [vmem:[%s261 + $0x30] sm:$0xff]
      %v301 = vld [vmem:[%s261 + $0x38] sm:$0xff]
      %v302 = vld [vmem:[%s266] sm:$0xff]
      %v303 = vld [vmem:[%s266 + $0x8] sm:$0xff]
      %v304 = vld [vmem:[%s266 + $0x10] sm:$0xff]
      %v305 = vld [vmem:[%s266 + $0x18] sm:$0xff]
      %v306 = vld [vmem:[%s266 + $0x20] sm:$0xff]
      %v307 = vld [vmem:[%s266 + $0x28] sm:$0xff]
      %v308 = vld [vmem:[%s266 + $0x30] sm:$0xff]
      %v309 = vld [vmem:[%s266 + $0x38] sm:$0xff]
      %v310 = vadd.f32 %v294, %v302
      %v311 = vadd.f32 %v295, %v303
      %v312 = vadd.f32 %v296, %v304
      %v313 = vadd.f32 %v297, %v305
      %v314 = vadd.f32 %v298, %v306
      %v315 = vadd.f32 %v299, %v307
      %v316 = vadd.f32 %v300, %v308
      %v317 = vadd.f32 %v301, %v309
      %v318 = vpack.c.bf16 %v311, %v310
      %v319 = vpack.c.bf16 %v313, %v312
      %v320 = vpack.c.bf16 %v315, %v314
      %v321 = vpack.c.bf16 %v317, %v316
      %326 = vrot.lane.b32.xlu0 %v318, 17
      %v327 = vpop.permute.xlu0 %326
      %328 = vrot.lane.b32.xlu0 %v319, 17
      %v329 = vpop.permute.xlu0 %328
      %330 = vrot.lane.b32.xlu0 %v320, 17
      %v331 = vpop.permute.xlu0 %330
      %332 = vrot.lane.b32.xlu0 %v321, 17
      %v333 = vpop.permute.xlu0 %332
      %v334 = vrot.slane %v327, 4
      %v335 = vrot.slane %v329, 4
      %v336 = vrot.slane %v331, 4
      %v337 = vrot.slane %v333, 4
      %vm338 = vcmask 138240
      %v339 = vsel %vm338, %v334, %v327
      %v340 = vsel %vm338, %v335, %v329
      %v341 = vsel %vm338, %v336, %v331
      %v342 = vsel %vm338, %v337, %v333
      %vm351 = vcmask 1043592
      %vm352 = vcmask 1047556
      %vm353 = vmor %vm352, %vm351
      %354 = vst.msk [vmem:[#allocation2] sm:$0xff] %vm353, %v339
      %355 = vst.msk [vmem:[#allocation2 + $0x8] sm:$0xf] %vm284, %v334
      %356 = vst.msk [vmem:[#allocation2 + $0xc] sm:$0xff] %vm353, %v340
      %357 = vst.msk [vmem:[#allocation2 + $0x14] sm:$0xf] %vm284, %v335
      %358 = vst.msk [vmem:[#allocation2 + $0x18] sm:$0xff] %vm353, %v341
      %359 = vst.msk [vmem:[#allocation2 + $0x20] sm:$0xf] %vm284, %v336
      %360 = vst.msk [vmem:[#allocation2 + $0x24] sm:$0xff] %vm353, %v342
      %361 = vst.msk [vmem:[#allocation2 + $0x2c] sm:$0xf] %vm284, %v337
      %v362 = vld [vmem:[%s3] sm:$0xff]
      %v363 = vld [vmem:[%s3 + $0x8] sm:$0xff]
      %v364 = vld [vmem:[%s3 + $0x10] sm:$0xff]
      %v365 = vld [vmem:[%s3 + $0x18] sm:$0xff]
      %367 = vset.pattern.permute.xlu0 0
      %368 = vperm.xlu0 %367, %v362
      %v369 = vpop.permute.xlu0 %368
      %372 = vset.pattern.permute.xlu0 0
      %373 = vperm.xlu0 %372, %v363
      %v374 = vpop.permute.xlu0 %373
      %377 = vset.pattern.permute.xlu0 0
      %378 = vperm.xlu0 %377, %v364
      %v379 = vpop.permute.xlu0 %378
      %382 = vset.pattern.permute.xlu0 0
      %383 = vperm.xlu0 %382, %v365
      %v384 = vpop.permute.xlu0 %383
      %v386 = vld [vmem:[#allocation2] sm:$0xff]
      %v387 = vld [vmem:[#allocation2 + $0xc] sm:$0xff]
      %v388 = vld [vmem:[#allocation2 + $0x18] sm:$0xff]
      %v389 = vld [vmem:[#allocation2 + $0x24] sm:$0xff]
      %v390 = vsel %vm280, 1, 0
      %v391 = vsel %vm281, 1, 0
      %vm392 = vcmp.eq.s32.totalorder %v390, 1
      %vm393 = vcmp.eq.s32.totalorder %v391, 1
      %vm394 = vmpackc.low %vm393, %vm392
      %v395 = vsel %vm394, %v386, 0
      %v396 = vsel %vm394, %v387, 0
      %v397 = vsel %vm394, %v388, 0
      %v398 = vsel %vm394, %v389, 0
      %v399 = vld [vmem:[%s2] sm:$0xf]
      %v400 = vld [vmem:[%s2 + $0x4] sm:$0xf]
      %v401 = vld [vmem:[%s2 + $0x8] sm:$0xf]
      %v402 = vld [vmem:[%s2 + $0xc] sm:$0xf]
      %v407 = vunpack.c.l.b16 %v399
      %v408 = vunpack.c.l.b16 %v400
      %v409 = vunpack.c.l.b16 %v401
      %v410 = vunpack.c.l.b16 %v402
      %v411 = vpack.c.b16 %v408, %v407
      %v412 = vpack.c.b16 %v410, %v409
      %v417 = vunpack.c.l.b16 %v395
      %v418 = vunpack.c.h.b16 %v395
      %v419 = vunpack.c.l.b16 %v396
      %v420 = vunpack.c.h.b16 %v396
      %v421 = vunpack.c.l.b16 %v397
      %v422 = vunpack.c.h.b16 %v397
      %v423 = vunpack.c.l.b16 %v398
      %v424 = vunpack.c.h.b16 %v398
      %v425 = vpack.c.b16 %v419, %v417
      %v426 = vpack.c.b16 %v420, %v418
      %v427 = vpack.c.b16 %v423, %v421
      %v428 = vpack.c.b16 %v424, %v422
      %vm433 = vcmask 261120
      %v435 = vsel %vm433, %v411, 0
      %v438 = vsel %vm433, %v412, 0
      %440 = vmatpush.bf16.msra.mxu0 0
      %441 = vmatpush.bf16.msra.mxu0 0
      %442 = vmatpush.bf16.msra.mxu0 0
      %443 = vmatpush.bf16.msra.mxu0 0
      %444 = vmatpush.bf16.msra.mxu0 0
      %445 = vmatpush.bf16.msra.mxu0 0
      %446 = vmatpush.bf16.msra.mxu0 %v427
      %447 = vmatpush.bf16.msra.mxu0 %v425
      %448 = vmatmul.bf16.gmra.mxu0 %v435
      %v449 = vpop.f32.mrf.mxu0
      %v450 = vadd.f32 0.0, %v449
      %v451 = vpop.f32.mrf.mxu0
      %v452 = vadd.f32 0.0, %v451
      %453 = vmatmul.bf16.gmra.mxu0 %v438
      %v454 = vpop.f32.mrf.mxu0
      %v455 = vadd.f32 0.0, %v454
      %v456 = vpop.f32.mrf.mxu0
      %v457 = vadd.f32 0.0, %v456
      %458 = vdwg.mxu0
      %459 = vmatpush.bf16.msra.mxu0 0
      %460 = vmatpush.bf16.msra.mxu0 0
      %461 = vmatpush.bf16.msra.mxu0 0
      %462 = vmatpush.bf16.msra.mxu0 0
      %463 = vmatpush.bf16.msra.mxu0 0
      %464 = vmatpush.bf16.msra.mxu0 0
      %465 = vmatpush.bf16.msra.mxu0 %v428
      %466 = vmatpush.bf16.msra.mxu0 %v426
      %467 = vmatmul.bf16.gmra.mxu0 %v435
      %v468 = vpop.f32.mrf.mxu0
      %v469 = vadd.f32 0.0, %v468
      %v470 = vpop.f32.mrf.mxu0
      %v471 = vadd.f32 0.0, %v470
      %472 = vmatmul.bf16.gmra.mxu0 %v438
      %v473 = vpop.f32.mrf.mxu0
      %v474 = vadd.f32 0.0, %v473
      %v475 = vpop.f32.mrf.mxu0
      %v476 = vadd.f32 0.0, %v475
      %477 = vdwg.mxu0
      %v478 = vadd.f32 %v369, %v450
      %v479 = vadd.f32 %v369, %v469
      %v480 = vadd.f32 %v374, %v452
      %v481 = vadd.f32 %v374, %v471
      %v482 = vadd.f32 %v379, %v455
      %v483 = vadd.f32 %v379, %v474
      %v484 = vadd.f32 %v384, %v457
      %v485 = vadd.f32 %v384, %v476
      %v486 = vld [vmem:[#allocation2] sm:$0xff]
      %v487 = vld [vmem:[#allocation2 + $0x8] sm:$0xf]
      %v488 = vld [vmem:[#allocation2 + $0xc] sm:$0xff]
      %v489 = vld [vmem:[#allocation2 + $0x14] sm:$0xf]
      %v490 = vld [vmem:[#allocation2 + $0x18] sm:$0xff]
      %v491 = vld [vmem:[#allocation2 + $0x20] sm:$0xf]
      %v492 = vld [vmem:[#allocation2 + $0x24] sm:$0xff]
      %v493 = vld [vmem:[#allocation2 + $0x2c] sm:$0xf]
      %s494 = scalar_lea.vmem %s2, 16
      %v495 = vld [vmem:[%s494] sm:$0xf]
      %v496 = vld [vmem:[%s494 + $0x4] sm:$0xf]
      %v497 = vld [vmem:[%s494 + $0x8] sm:$0xf]
      %v498 = vld [vmem:[%s494 + $0xc] sm:$0xf]
      %v503 = vunpack.c.l.b16 %v495
      %v504 = vunpack.c.l.b16 %v496
      %v505 = vunpack.c.l.b16 %v497
      %v506 = vunpack.c.l.b16 %v498
      %v507 = vpack.c.b16 %v504, %v503
      %v508 = vpack.c.b16 %v506, %v505
      %v517 = vunpack.c.l.b16 %v486
      %v518 = vunpack.c.h.b16 %v486
      %v519 = vunpack.c.l.b16 %v487
      %v520 = vunpack.c.l.b16 %v488
      %v521 = vunpack.c.h.b16 %v488
      %v522 = vunpack.c.l.b16 %v489
      %v523 = vunpack.c.l.b16 %v490
      %v524 = vunpack.c.h.b16 %v490
      %v525 = vunpack.c.l.b16 %v491
      %v526 = vunpack.c.l.b16 %v492
      %v527 = vunpack.c.h.b16 %v492
      %v528 = vunpack.c.l.b16 %v493
      %v529 = vpack.c.b16 %v520, %v517
      %v530 = vpack.c.b16 %v521, %v518
      %v531 = vpack.c.b16 %v522, %v519
      %v532 = vpack.c.b16 %v526, %v523
      %v533 = vpack.c.b16 %v527, %v524
      %v534 = vpack.c.b16 %v528, %v525
      %535 = vrot.lane.b32.xlu0 %v529, 127
      %v536 = vpop.permute.xlu0 %535
      %537 = vrot.lane.b32.xlu0 %v530, 127
      %v538 = vpop.permute.xlu0 %537
      %539 = vrot.lane.b32.xlu0 %v531, 127
      %v540 = vpop.permute.xlu0 %539
      %541 = vrot.lane.b32.xlu0 %v532, 127
      %v542 = vpop.permute.xlu0 %541
      %543 = vrot.lane.b32.xlu0 %v533, 127
      %v544 = vpop.permute.xlu0 %543
      %545 = vrot.lane.b32.xlu0 %v534, 127
      %v546 = vpop.permute.xlu0 %545
      %vm547 = vcmask 1039360
      %v548 = vsel %vm547, %v536, %v538
      %v549 = vsel %vm547, %v538, %v540
      %v550 = vsel %vm547, %v542, %v544
      %v551 = vsel %vm547, %v544, %v546
      %v557 = vsel %vm433, %v507, 0
      %v560 = vsel %vm433, %v508, 0
      %562 = vmatpush.bf16.msra.mxu0 0
      %563 = vmatpush.bf16.msra.mxu0 0
      %564 = vmatpush.bf16.msra.mxu0 0
      %565 = vmatpush.bf16.msra.mxu0 0
      %566 = vmatpush.bf16.msra.mxu0 0
      %567 = vmatpush.bf16.msra.mxu0 0
      %568 = vmatpush.bf16.msra.mxu0 %v550
      %569 = vmatpush.bf16.msra.mxu0 %v548
      %570 = vmatmul.bf16.gmra.mxu0 %v557
      %v571 = vpop.f32.mrf.mxu0
      %v572 = vadd.f32 0.0, %v571
      %v573 = vpop.f32.mrf.mxu0
      %v574 = vadd.f32 0.0, %v573
      %575 = vmatmul.bf16.gmra.mxu0 %v560
      %v576 = vpop.f32.mrf.mxu0
      %v577 = vadd.f32 0.0, %v576
      %v578 = vpop.f32.mrf.mxu0
      %v579 = vadd.f32 0.0, %v578
      %580 = vdwg.mxu0
      %581 = vmatpush.bf16.msra.mxu0 0
      %582 = vmatpush.bf16.msra.mxu0 0
      %583 = vmatpush.bf16.msra.mxu0 0
      %584 = vmatpush.bf16.msra.mxu0 0
      %585 = vmatpush.bf16.msra.mxu0 0
      %586 = vmatpush.bf16.msra.mxu0 0
      %587 = vmatpush.bf16.msra.mxu0 %v551
      %588 = vmatpush.bf16.msra.mxu0 %v549
      %589 = vmatmul.bf16.gmra.mxu0 %v557
      %v590 = vpop.f32.mrf.mxu0
      %v591 = vadd.f32 0.0, %v590
      %v592 = vpop.f32.mrf.mxu0
      %v593 = vadd.f32 0.0, %v592
      %594 = vmatmul.bf16.gmra.mxu0 %v560
      %v595 = vpop.f32.mrf.mxu0
      %v596 = vadd.f32 0.0, %v595
      %v597 = vpop.f32.mrf.mxu0
      %v598 = vadd.f32 0.0, %v597
      %599 = vdwg.mxu0
      %v600 = vadd.f32 %v478, %v572
      %v601 = vadd.f32 %v479, %v591
      %v602 = vadd.f32 %v480, %v574
      %v603 = vadd.f32 %v481, %v593
      %v604 = vadd.f32 %v482, %v577
      %v605 = vadd.f32 %v483, %v596
      %v606 = vadd.f32 %v484, %v579
      %v607 = vadd.f32 %v485, %v598
      %v608 = vsel %vm282, 1, 0
      %v609 = vsel %vm283, 1, 0
      %vm610 = vcmp.eq.s32.totalorder %v608, 1
      %vm611 = vcmp.eq.s32.totalorder %v609, 1
      %vm612 = vmpackc.low %vm611, %vm610
      %v613 = vsel %vm612, 65537, 0
      %614 = vrot.lane.b32.xlu0 %v613, 2
      %v615 = vpop.permute.xlu0 %614
      %v616 = vrot.slane %v615, 4
      %vm617 = vcmask 15360
      %v618 = vsel %vm617, %v616, %v615
      %v619 = vunpack.c.l.b16 %v618
      %v620 = vunpack.c.h.b16 %v618
      %v621 = vunpack.c.l.b16 0
      %v622 = vunpack.c.h.b16 0
      %vm623 = vcmp.ne.s32.totalorder %v619, %v621
      %vm624 = vcmp.ne.s32.totalorder %v620, %v622
      %vm625 = vmpackc.low %vm624, %vm623
      %v626 = vunpack.c.l.b16 %v616
      %v627 = vunpack.c.h.b16 %v616
      %v628 = vunpack.c.l.b16 0
      %v629 = vunpack.c.h.b16 0
      %vm630 = vcmp.ne.s32.totalorder %v626, %v628
      %vm631 = vcmp.ne.s32.totalorder %v627, %v629
      %vm632 = vmpackc.low %vm631, %vm630
      %v633 = vsel %vm625, %v486, 0
      %v634 = vsel %vm632, %v487, 0
      %v635 = vsel %vm625, %v488, 0
      %v636 = vsel %vm632, %v489, 0
      %v637 = vsel %vm625, %v490, 0
      %v638 = vsel %vm632, %v491, 0
      %v639 = vsel %vm625, %v492, 0
      %v640 = vsel %vm632, %v493, 0
      %s641 = scalar_lea.vmem %s2, 32
      %v642 = vld [vmem:[%s641] sm:$0xf]
      %v643 = vld [vmem:[%s641 + $0x4] sm:$0xf]
      %v644 = vld [vmem:[%s641 + $0x8] sm:$0xf]
      %v645 = vld [vmem:[%s641 + $0xc] sm:$0xf]
      %v650 = vunpack.c.l.b16 %v642
      %v651 = vunpack.c.l.b16 %v643
      %v652 = vunpack.c.l.b16 %v644
      %v653 = vunpack.c.l.b16 %v645
      %v654 = vpack.c.b16 %v651, %v650
      %v655 = vpack.c.b16 %v653, %v652
      %v664 = vunpack.c.l.b16 %v633
      %v665 = vunpack.c.h.b16 %v633
      %v666 = vunpack.c.l.b16 %v634
      %v667 = vunpack.c.l.b16 %v635
      %v668 = vunpack.c.h.b16 %v635
      %v669 = vunpack.c.l.b16 %v636
      %v670 = vunpack.c.l.b16 %v637
      %v671 = vunpack.c.h.b16 %v637
      %v672 = vunpack.c.l.b16 %v638
      %v673 = vunpack.c.l.b16 %v639
      %v674 = vunpack.c.h.b16 %v639
      %v675 = vunpack.c.l.b16 %v640
      %v676 = vpack.c.b16 %v667, %v664
      %v677 = vpack.c.b16 %v668, %v665
      %v678 = vpack.c.b16 %v669, %v666
      %v679 = vpack.c.b16 %v673, %v670
      %v680 = vpack.c.b16 %v674, %v671
      %v681 = vpack.c.b16 %v675, %v672
      %682 = vrot.lane.b32.xlu0 %v676, 126
      %v683 = vpop.permute.xlu0 %682
      %684 = vrot.lane.b32.xlu0 %v677, 126
      %v685 = vpop.permute.xlu0 %684
      %686 = vrot.lane.b32.xlu0 %v678, 126
      %v687 = vpop.permute.xlu0 %686
      %688 = vrot.lane.b32.xlu0 %v679, 126
      %v689 = vpop.permute.xlu0 %688
      %690 = vrot.lane.b32.xlu0 %v680, 126
      %v691 = vpop.permute.xlu0 %690
      %692 = vrot.lane.b32.xlu0 %v681, 126
      %v693 = vpop.permute.xlu0 %692
      %vm694 = vcmask 1031168
      %v695 = vsel %vm694, %v683, %v685
      %v696 = vsel %vm694, %v685, %v687
      %v697 = vsel %vm694, %v689, %v691
      %v698 = vsel %vm694, %v691, %v693
      %v704 = vsel %vm433, %v654, 0
      %v707 = vsel %vm433, %v655, 0
      %709 = vmatpush.bf16.msra.mxu0 0
      %710 = vmatpush.bf16.msra.mxu0 0
      %711 = vmatpush.bf16.msra.mxu0 0
      %712 = vmatpush.bf16.msra.mxu0 0
      %713 = vmatpush.bf16.msra.mxu0 0
      %714 = vmatpush.bf16.msra.mxu0 0
      %715 = vmatpush.bf16.msra.mxu0 %v697
      %716 = vmatpush.bf16.msra.mxu0 %v695
      %717 = vmatmul.bf16.gmra.mxu0 %v704
      %v718 = vpop.f32.mrf.mxu0
      %v719 = vadd.f32 0.0, %v718
      %v720 = vpop.f32.mrf.mxu0
      %v721 = vadd.f32 0.0, %v720
      %722 = vmatmul.bf16.gmra.mxu0 %v707
      %v723 = vpop.f32.mrf.mxu0
      %v724 = vadd.f32 0.0, %v723
      %v725 = vpop.f32.mrf.mxu0
      %v726 = vadd.f32 0.0, %v725
      %727 = vdwg.mxu0
      %728 = vmatpush.bf16.msra.mxu0 0
      %729 = vmatpush.bf16.msra.mxu0 0
      %730 = vmatpush.bf16.msra.mxu0 0
      %731 = vmatpush.bf16.msra.mxu0 0
      %732 = vmatpush.bf16.msra.mxu0 0
      %733 = vmatpush.bf16.msra.mxu0 0
      %734 = vmatpush.bf16.msra.mxu0 %v698
      %735 = vmatpush.bf16.msra.mxu0 %v696
      %736 = vmatmul.bf16.gmra.mxu0 %v704
      %v737 = vpop.f32.mrf.mxu0
      %v738 = vadd.f32 0.0, %v737
      %v739 = vpop.f32.mrf.mxu0
      %v740 = vadd.f32 0.0, %v739
      %741 = vmatmul.bf16.gmra.mxu0 %v707
      %v742 = vpop.f32.mrf.mxu0
      %v743 = vadd.f32 0.0, %v742
      %v744 = vpop.f32.mrf.mxu0
      %v745 = vadd.f32 0.0, %v744
      %746 = vdwg.mxu0
      %v747 = vadd.f32 %v600, %v719
      %v748 = vadd.f32 %v601, %v738
      %v749 = vadd.f32 %v602, %v721
      %v750 = vadd.f32 %v603, %v740
      %v751 = vadd.f32 %v604, %v724
      %v752 = vadd.f32 %v605, %v743
      %v753 = vadd.f32 %v606, %v726
      %v754 = vadd.f32 %v607, %v745
      %v755 = vsel %vm394, 65537, 0
      %756 = vrot.lane.b32.xlu0 %v755, 16
      %v757 = vpop.permute.xlu0 %756
      %v758 = vrot.slane %v757, 4
      %vm759 = vcmask 130048
      %v760 = vsel %vm759, %v758, %v757
      %v761 = vunpack.c.l.b16 %v760
      %v762 = vunpack.c.h.b16 %v760
      %v763 = vunpack.c.l.b16 0
      %v764 = vunpack.c.h.b16 0
      %vm765 = vcmp.ne.s32.totalorder %v761, %v763
      %vm766 = vcmp.ne.s32.totalorder %v762, %v764
      %vm767 = vmpackc.low %vm766, %vm765
      %v768 = vunpack.c.l.b16 %v758
      %v769 = vunpack.c.h.b16 %v758
      %v770 = vunpack.c.l.b16 0
      %v771 = vunpack.c.h.b16 0
      %vm772 = vcmp.ne.s32.totalorder %v768, %v770
      %vm773 = vcmp.ne.s32.totalorder %v769, %v771
      %vm774 = vmpackc.low %vm773, %vm772
      %v775 = vsel %vm767, %v486, 0
      %v776 = vsel %vm774, %v487, 0
      %v777 = vsel %vm767, %v488, 0
      %v778 = vsel %vm774, %v489, 0
      %v779 = vsel %vm767, %v490, 0
      %v780 = vsel %vm774, %v491, 0
      %v781 = vsel %vm767, %v492, 0
      %v782 = vsel %vm774, %v493, 0
      %s783 = scalar_lea.vmem %s2, 48
      %v784 = vld [vmem:[%s783] sm:$0xf]
      %v785 = vld [vmem:[%s783 + $0x4] sm:$0xf]
      %v786 = vld [vmem:[%s783 + $0x8] sm:$0xf]
      %v787 = vld [vmem:[%s783 + $0xc] sm:$0xf]
      %v792 = vunpack.c.l.b16 %v784
      %v793 = vunpack.c.l.b16 %v785
      %v794 = vunpack.c.l.b16 %v786
      %v795 = vunpack.c.l.b16 %v787
      %v796 = vpack.c.b16 %v793, %v792
      %v797 = vpack.c.b16 %v795, %v794
      %v806 = vunpack.c.l.b16 %v775
      %v807 = vunpack.c.h.b16 %v775
      %v808 = vunpack.c.l.b16 %v776
      %v809 = vunpack.c.l.b16 %v777
      %v810 = vunpack.c.h.b16 %v777
      %v811 = vunpack.c.l.b16 %v778
      %v812 = vunpack.c.l.b16 %v779
      %v813 = vunpack.c.h.b16 %v779
      %v814 = vunpack.c.l.b16 %v780
      %v815 = vunpack.c.l.b16 %v781
      %v816 = vunpack.c.h.b16 %v781
      %v817 = vunpack.c.l.b16 %v782
      %v818 = vpack.c.b16 %v809, %v806
      %v819 = vpack.c.b16 %v810, %v807
      %v820 = vpack.c.b16 %v811, %v808
      %v821 = vpack.c.b16 %v815, %v812
      %v822 = vpack.c.b16 %v816, %v813
      %v823 = vpack.c.b16 %v817, %v814
      %824 = vrot.lane.b32.xlu0 %v818, 112
      %v825 = vpop.permute.xlu0 %824
      %826 = vrot.lane.b32.xlu0 %v819, 112
      %v827 = vpop.permute.xlu0 %826
      %828 = vrot.lane.b32.xlu0 %v820, 112
      %v829 = vpop.permute.xlu0 %828
      %830 = vrot.lane.b32.xlu0 %v821, 112
      %v831 = vpop.permute.xlu0 %830
      %832 = vrot.lane.b32.xlu0 %v822, 112
      %v833 = vpop.permute.xlu0 %832
      %834 = vrot.lane.b32.xlu0 %v823, 112
      %v835 = vpop.permute.xlu0 %834
      %vm836 = vcmask 916480
      %v837 = vsel %vm836, %v825, %v827
      %v838 = vsel %vm836, %v827, %v829
      %v839 = vsel %vm836, %v831, %v833
      %v840 = vsel %vm836, %v833, %v835
      %v846 = vsel %vm433, %v796, 0
      %v849 = vsel %vm433, %v797, 0
      %851 = vmatpush.bf16.msra.mxu0 0
      %852 = vmatpush.bf16.msra.mxu0 0
      %853 = vmatpush.bf16.msra.mxu0 0
      %854 = vmatpush.bf16.msra.mxu0 0
      %855 = vmatpush.bf16.msra.mxu0 0
      %856 = vmatpush.bf16.msra.mxu0 0
      %857 = vmatpush.bf16.msra.mxu0 %v839
      %858 = vmatpush.bf16.msra.mxu0 %v837
      %859 = vmatmul.bf16.gmra.mxu0 %v846
      %v860 = vpop.f32.mrf.mxu0
      %v861 = vadd.f32 0.0, %v860
      %v862 = vpop.f32.mrf.mxu0
      %v863 = vadd.f32 0.0, %v862
      %864 = vmatmul.bf16.gmra.mxu0 %v849
      %v865 = vpop.f32.mrf.mxu0
      %v866 = vadd.f32 0.0, %v865
      %v867 = vpop.f32.mrf.mxu0
      %v868 = vadd.f32 0.0, %v867
      %869 = vdwg.mxu0
      %870 = vmatpush.bf16.msra.mxu0 0
      %871 = vmatpush.bf16.msra.mxu0 0
      %872 = vmatpush.bf16.msra.mxu0 0
      %873 = vmatpush.bf16.msra.mxu0 0
      %874 = vmatpush.bf16.msra.mxu0 0
      %875 = vmatpush.bf16.msra.mxu0 0
      %876 = vmatpush.bf16.msra.mxu0 %v840
      %877 = vmatpush.bf16.msra.mxu0 %v838
      %878 = vmatmul.bf16.gmra.mxu0 %v846
      %v879 = vpop.f32.mrf.mxu0
      %v880 = vadd.f32 0.0, %v879
      %v881 = vpop.f32.mrf.mxu0
      %v882 = vadd.f32 0.0, %v881
      %883 = vmatmul.bf16.gmra.mxu0 %v849
      %v884 = vpop.f32.mrf.mxu0
      %v885 = vadd.f32 0.0, %v884
      %v886 = vpop.f32.mrf.mxu0
      %v887 = vadd.f32 0.0, %v886
      %888 = vdwg.mxu0
      %v889 = vadd.f32 %v747, %v861
      %v890 = vadd.f32 %v748, %v880
      %v891 = vadd.f32 %v749, %v863
      %v892 = vadd.f32 %v750, %v882
      %v893 = vadd.f32 %v751, %v866
      %v894 = vadd.f32 %v752, %v885
      %v895 = vadd.f32 %v753, %v868
      %v896 = vadd.f32 %v754, %v887
      %s897 = scalar_lea.vmem %s2, 64
      %v898 = vld [vmem:[%s897] sm:$0xf]
      %v899 = vld [vmem:[%s897 + $0x4] sm:$0xf]
      %v900 = vld [vmem:[%s897 + $0x8] sm:$0xf]
      %v901 = vld [vmem:[%s897 + $0xc] sm:$0xf]
      %v906 = vunpack.c.l.b16 %v898
      %v907 = vunpack.c.l.b16 %v899
      %v908 = vunpack.c.l.b16 %v900
      %v909 = vunpack.c.l.b16 %v901
      %v910 = vpack.c.b16 %v907, %v906
      %v911 = vpack.c.b16 %v909, %v908
      %912 = vrot.lane.b32.xlu0 %v529, 111
      %v913 = vpop.permute.xlu0 %912
      %914 = vrot.lane.b32.xlu0 %v530, 111
      %v915 = vpop.permute.xlu0 %914
      %916 = vrot.lane.b32.xlu0 %v531, 111
      %v917 = vpop.permute.xlu0 %916
      %918 = vrot.lane.b32.xlu0 %v532, 111
      %v919 = vpop.permute.xlu0 %918
      %920 = vrot.lane.b32.xlu0 %v533, 111
      %v921 = vpop.permute.xlu0 %920
      %922 = vrot.lane.b32.xlu0 %v534, 111
      %v923 = vpop.permute.xlu0 %922
      %vm924 = vcmask 908288
      %v925 = vsel %vm924, %v913, %v915
      %v926 = vsel %vm924, %v915, %v917
      %v927 = vsel %vm924, %v919, %v921
      %v928 = vsel %vm924, %v921, %v923
      %v934 = vsel %vm433, %v910, 0
      %v937 = vsel %vm433, %v911, 0
      %939 = vmatpush.bf16.msra.mxu0 0
      %940 = vmatpush.bf16.msra.mxu0 0
      %941 = vmatpush.bf16.msra.mxu0 0
      %942 = vmatpush.bf16.msra.mxu0 0
      %943 = vmatpush.bf16.msra.mxu0 0
      %944 = vmatpush.bf16.msra.mxu0 0
      %945 = vmatpush.bf16.msra.mxu0 %v927
      %946 = vmatpush.bf16.msra.mxu0 %v925
      %947 = vmatmul.bf16.gmra.mxu0 %v934
      %v948 = vpop.f32.mrf.mxu0
      %v949 = vadd.f32 0.0, %v948
      %v950 = vpop.f32.mrf.mxu0
      %v951 = vadd.f32 0.0, %v950
      %952 = vmatmul.bf16.gmra.mxu0 %v937
      %v953 = vpop.f32.mrf.mxu0
      %v954 = vadd.f32 0.0, %v953
      %v955 = vpop.f32.mrf.mxu0
      %v956 = vadd.f32 0.0, %v955
      %957 = vdwg.mxu0
      %958 = vmatpush.bf16.msra.mxu0 0
      %959 = vmatpush.bf16.msra.mxu0 0
      %960 = vmatpush.bf16.msra.mxu0 0
      %961 = vmatpush.bf16.msra.mxu0 0
      %962 = vmatpush.bf16.msra.mxu0 0
      %963 = vmatpush.bf16.msra.mxu0 0
      %964 = vmatpush.bf16.msra.mxu0 %v928
      %965 = vmatpush.bf16.msra.mxu0 %v926
      %966 = vmatmul.bf16.gmra.mxu0 %v934
      %v967 = vpop.f32.mrf.mxu0
      %v968 = vadd.f32 0.0, %v967
      %v969 = vpop.f32.mrf.mxu0
      %v970 = vadd.f32 0.0, %v969
      %971 = vmatmul.bf16.gmra.mxu0 %v937
      %v972 = vpop.f32.mrf.mxu0
      %v973 = vadd.f32 0.0, %v972
      %v974 = vpop.f32.mrf.mxu0
      %v975 = vadd.f32 0.0, %v974
      %976 = vdwg.mxu0
      %v977 = vadd.f32 %v889, %v949
      %v978 = vadd.f32 %v890, %v968
      %v979 = vadd.f32 %v891, %v951
      %v980 = vadd.f32 %v892, %v970
      %v981 = vadd.f32 %v893, %v954
      %v982 = vadd.f32 %v894, %v973
      %v983 = vadd.f32 %v895, %v956
      %v984 = vadd.f32 %v896, %v975
      %985 = vrot.lane.b32.xlu0 %v613, 18
      %v986 = vpop.permute.xlu0 %985
      %v987 = vrot.slane %v986, 4
      %vm988 = vcmask 146432
      %v989 = vsel %vm988, %v987, %v986
      %v990 = vunpack.c.l.b16 %v989
      %v991 = vunpack.c.h.b16 %v989
      %v992 = vunpack.c.l.b16 0
      %v993 = vunpack.c.h.b16 0
      %vm994 = vcmp.ne.s32.totalorder %v990, %v992
      %vm995 = vcmp.ne.s32.totalorder %v991, %v993
      %vm996 = vmpackc.low %vm995, %vm994
      %v997 = vunpack.c.l.b16 %v987
      %v998 = vunpack.c.h.b16 %v987
      %v999 = vunpack.c.l.b16 0
      %v1000 = vunpack.c.h.b16 0
      %vm1001 = vcmp.ne.s32.totalorder %v997, %v999
      %vm1002 = vcmp.ne.s32.totalorder %v998, %v1000
      %vm1003 = vmpackc.low %vm1002, %vm1001
      %v1004 = vsel %vm996, %v486, 0
      %v1005 = vsel %vm1003, %v487, 0
      %v1006 = vsel %vm996, %v488, 0
      %v1007 = vsel %vm1003, %v489, 0
      %v1008 = vsel %vm996, %v490, 0
      %v1009 = vsel %vm1003, %v491, 0
      %v1010 = vsel %vm996, %v492, 0
      %v1011 = vsel %vm1003, %v493, 0
      %s1012 = scalar_lea.vmem %s2, 80
      %v1013 = vld [vmem:[%s1012] sm:$0xf]
      %v1014 = vld [vmem:[%s1012 + $0x4] sm:$0xf]
      %v1015 = vld [vmem:[%s1012 + $0x8] sm:$0xf]
      %v1016 = vld [vmem:[%s1012 + $0xc] sm:$0xf]
      %v1021 = vunpack.c.l.b16 %v1013
      %v1022 = vunpack.c.l.b16 %v1014
      %v1023 = vunpack.c.l.b16 %v1015
      %v1024 = vunpack.c.l.b16 %v1016
      %v1025 = vpack.c.b16 %v1022, %v1021
      %v1026 = vpack.c.b16 %v1024, %v1023
      %v1035 = vunpack.c.l.b16 %v1004
      %v1036 = vunpack.c.h.b16 %v1004
      %v1037 = vunpack.c.l.b16 %v1005
      %v1038 = vunpack.c.l.b16 %v1006
      %v1039 = vunpack.c.h.b16 %v1006
      %v1040 = vunpack.c.l.b16 %v1007
      %v1041 = vunpack.c.l.b16 %v1008
      %v1042 = vunpack.c.h.b16 %v1008
      %v1043 = vunpack.c.l.b16 %v1009
      %v1044 = vunpack.c.l.b16 %v1010
      %v1045 = vunpack.c.h.b16 %v1010
      %v1046 = vunpack.c.l.b16 %v1011
      %v1047 = vpack.c.b16 %v1038, %v1035
      %v1048 = vpack.c.b16 %v1039, %v1036
      %v1049 = vpack.c.b16 %v1040, %v1037
      %v1050 = vpack.c.b16 %v1044, %v1041
      %v1051 = vpack.c.b16 %v1045, %v1042
      %v1052 = vpack.c.b16 %v1046, %v1043
      %1053 = vrot.lane.b32.xlu0 %v1047, 110
      %v1054 = vpop.permute.xlu0 %1053
      %1055 = vrot.lane.b32.xlu0 %v1048, 110
      %v1056 = vpop.permute.xlu0 %1055
      %1057 = vrot.lane.b32.xlu0 %v1049, 110
      %v1058 = vpop.permute.xlu0 %1057
      %1059 = vrot.lane.b32.xlu0 %v1050, 110
      %v1060 = vpop.permute.xlu0 %1059
      %1061 = vrot.lane.b32.xlu0 %v1051, 110
      %v1062 = vpop.permute.xlu0 %1061
      %1063 = vrot.lane.b32.xlu0 %v1052, 110
      %v1064 = vpop.permute.xlu0 %1063
      %vm1065 = vcmask 900096
      %v1066 = vsel %vm1065, %v1054, %v1056
      %v1067 = vsel %vm1065, %v1056, %v1058
      %v1068 = vsel %vm1065, %v1060, %v1062
      %v1069 = vsel %vm1065, %v1062, %v1064
      %v1075 = vsel %vm433, %v1025, 0
      %v1078 = vsel %vm433, %v1026, 0
      %1080 = vmatpush.bf16.msra.mxu0 0
      %1081 = vmatpush.bf16.msra.mxu0 0
      %1082 = vmatpush.bf16.msra.mxu0 0
      %1083 = vmatpush.bf16.msra.mxu0 0
      %1084 = vmatpush.bf16.msra.mxu0 0
      %1085 = vmatpush.bf16.msra.mxu0 0
      %1086 = vmatpush.bf16.msra.mxu0 %v1068
      %1087 = vmatpush.bf16.msra.mxu0 %v1066
      %1088 = vmatmul.bf16.gmra.mxu0 %v1075
      %v1089 = vpop.f32.mrf.mxu0
      %v1090 = vadd.f32 0.0, %v1089
      %v1091 = vpop.f32.mrf.mxu0
      %v1092 = vadd.f32 0.0, %v1091
      %1093 = vmatmul.bf16.gmra.mxu0 %v1078
      %v1094 = vpop.f32.mrf.mxu0
      %v1095 = vadd.f32 0.0, %v1094
      %v1096 = vpop.f32.mrf.mxu0
      %v1097 = vadd.f32 0.0, %v1096
      %1098 = vdwg.mxu0
      %1099 = vmatpush.bf16.msra.mxu0 0
      %1100 = vmatpush.bf16.msra.mxu0 0
      %1101 = vmatpush.bf16.msra.mxu0 0
      %1102 = vmatpush.bf16.msra.mxu0 0
      %1103 = vmatpush.bf16.msra.mxu0 0
      %1104 = vmatpush.bf16.msra.mxu0 0
      %1105 = vmatpush.bf16.msra.mxu0 %v1069
      %1106 = vmatpush.bf16.msra.mxu0 %v1067
      %1107 = vmatmul.bf16.gmra.mxu0 %v1075
      %v1108 = vpop.f32.mrf.mxu0
      %v1109 = vadd.f32 0.0, %v1108
      %v1110 = vpop.f32.mrf.mxu0
      %v1111 = vadd.f32 0.0, %v1110
      %1112 = vmatmul.bf16.gmra.mxu0 %v1078
      %v1113 = vpop.f32.mrf.mxu0
      %v1114 = vadd.f32 0.0, %v1113
      %v1115 = vpop.f32.mrf.mxu0
      %v1116 = vadd.f32 0.0, %v1115
      %1117 = vdwg.mxu0
      %v1118 = vadd.f32 %v977, %v1090
      %v1119 = vadd.f32 %v978, %v1109
      %v1120 = vadd.f32 %v979, %v1092
      %v1121 = vadd.f32 %v980, %v1111
      %v1122 = vadd.f32 %v981, %v1095
      %v1123 = vadd.f32 %v982, %v1114
      %v1124 = vadd.f32 %v983, %v1097
      %v1125 = vadd.f32 %v984, %v1116
      %1126 = vrot.lane.b32.xlu0 %v755, 32
      %v1127 = vpop.permute.xlu0 %1126
      %v1128 = vrot.slane %v1127, 4
      %vm1129 = vcmask 261120
      %v1130 = vsel %vm1129, %v1128, %v1127
      %v1131 = vunpack.c.l.b16 %v1130
      %v1132 = vunpack.c.h.b16 %v1130
      %v1133 = vunpack.c.l.b16 0
      %v1134 = vunpack.c.h.b16 0
      %vm1135 = vcmp.ne.s32.totalorder %v1131, %v1133
      %vm1136 = vcmp.ne.s32.totalorder %v1132, %v1134
      %vm1137 = vmpackc.low %vm1136, %vm1135
      %v1138 = vunpack.c.l.b16 %v1128
      %v1139 = vunpack.c.h.b16 %v1128
      %v1140 = vunpack.c.l.b16 0
      %v1141 = vunpack.c.h.b16 0
      %vm1142 = vcmp.ne.s32.totalorder %v1138, %v1140
      %vm1143 = vcmp.ne.s32.totalorder %v1139, %v1141
      %vm1144 = vmpackc.low %vm1143, %vm1142
      %v1145 = vsel %vm1137, %v486, 0
      %v1146 = vsel %vm1144, %v487, 0
      %v1147 = vsel %vm1137, %v488, 0
      %v1148 = vsel %vm1144, %v489, 0
      %v1149 = vsel %vm1137, %v490, 0
      %v1150 = vsel %vm1144, %v491, 0
      %v1151 = vsel %vm1137, %v492, 0
      %v1152 = vsel %vm1144, %v493, 0
      %s1153 = scalar_lea.vmem %s2, 96
      %v1154 = vld [vmem:[%s1153] sm:$0xf]
      %v1155 = vld [vmem:[%s1153 + $0x4] sm:$0xf]
      %v1156 = vld [vmem:[%s1153 + $0x8] sm:$0xf]
      %v1157 = vld [vmem:[%s1153 + $0xc] sm:$0xf]
      %v1162 = vunpack.c.l.b16 %v1154
      %v1163 = vunpack.c.l.b16 %v1155
      %v1164 = vunpack.c.l.b16 %v1156
      %v1165 = vunpack.c.l.b16 %v1157
      %v1166 = vpack.c.b16 %v1163, %v1162
      %v1167 = vpack.c.b16 %v1165, %v1164
      %v1176 = vunpack.c.l.b16 %v1145
      %v1177 = vunpack.c.h.b16 %v1145
      %v1178 = vunpack.c.l.b16 %v1146
      %v1179 = vunpack.c.l.b16 %v1147
      %v1180 = vunpack.c.h.b16 %v1147
      %v1181 = vunpack.c.l.b16 %v1148
      %v1182 = vunpack.c.l.b16 %v1149
      %v1183 = vunpack.c.h.b16 %v1149
      %v1184 = vunpack.c.l.b16 %v1150
      %v1185 = vunpack.c.l.b16 %v1151
      %v1186 = vunpack.c.h.b16 %v1151
      %v1187 = vunpack.c.l.b16 %v1152
      %v1188 = vpack.c.b16 %v1179, %v1176
      %v1189 = vpack.c.b16 %v1180, %v1177
      %v1190 = vpack.c.b16 %v1181, %v1178
      %v1191 = vpack.c.b16 %v1185, %v1182
      %v1192 = vpack.c.b16 %v1186, %v1183
      %v1193 = vpack.c.b16 %v1187, %v1184
      %1194 = vrot.lane.b32.xlu0 %v1188, 96
      %v1195 = vpop.permute.xlu0 %1194
      %1196 = vrot.lane.b32.xlu0 %v1189, 96
      %v1197 = vpop.permute.xlu0 %1196
      %1198 = vrot.lane.b32.xlu0 %v1190, 96
      %v1199 = vpop.permute.xlu0 %1198
      %1200 = vrot.lane.b32.xlu0 %v1191, 96
      %v1201 = vpop.permute.xlu0 %1200
      %1202 = vrot.lane.b32.xlu0 %v1192, 96
      %v1203 = vpop.permute.xlu0 %1202
      %1204 = vrot.lane.b32.xlu0 %v1193, 96
      %v1205 = vpop.permute.xlu0 %1204
      %vm1206 = vcmask 785408
      %v1207 = vsel %vm1206, %v1195, %v1197
      %v1208 = vsel %vm1206, %v1197, %v1199
      %v1209 = vsel %vm1206, %v1201, %v1203
      %v1210 = vsel %vm1206, %v1203, %v1205
      %v1216 = vsel %vm433, %v1166, 0
      %v1219 = vsel %vm433, %v1167, 0
      %1221 = vmatpush.bf16.msra.mxu0 0
      %1222 = vmatpush.bf16.msra.mxu0 0
      %1223 = vmatpush.bf16.msra.mxu0 0
      %1224 = vmatpush.bf16.msra.mxu0 0
      %1225 = vmatpush.bf16.msra.mxu0 0
      %1226 = vmatpush.bf16.msra.mxu0 0
      %1227 = vmatpush.bf16.msra.mxu0 %v1209
      %1228 = vmatpush.bf16.msra.mxu0 %v1207
      %1229 = vmatmul.bf16.gmra.mxu0 %v1216
      %v1230 = vpop.f32.mrf.mxu0
      %v1231 = vadd.f32 0.0, %v1230
      %v1232 = vpop.f32.mrf.mxu0
      %v1233 = vadd.f32 0.0, %v1232
      %1234 = vmatmul.bf16.gmra.mxu0 %v1219
      %v1235 = vpop.f32.mrf.mxu0
      %v1236 = vadd.f32 0.0, %v1235
      %v1237 = vpop.f32.mrf.mxu0
      %v1238 = vadd.f32 0.0, %v1237
      %1239 = vdwg.mxu0
      %1240 = vmatpush.bf16.msra.mxu0 0
      %1241 = vmatpush.bf16.msra.mxu0 0
      %1242 = vmatpush.bf16.msra.mxu0 0
      %1243 = vmatpush.bf16.msra.mxu0 0
      %1244 = vmatpush.bf16.msra.mxu0 0
      %1245 = vmatpush.bf16.msra.mxu0 0
      %1246 = vmatpush.bf16.msra.mxu0 %v1210
      %1247 = vmatpush.bf16.msra.mxu0 %v1208
      %1248 = vmatmul.bf16.gmra.mxu0 %v1216
      %v1249 = vpop.f32.mrf.mxu0
      %v1250 = vadd.f32 0.0, %v1249
      %v1251 = vpop.f32.mrf.mxu0
      %v1252 = vadd.f32 0.0, %v1251
      %1253 = vmatmul.bf16.gmra.mxu0 %v1219
      %v1254 = vpop.f32.mrf.mxu0
      %v1255 = vadd.f32 0.0, %v1254
      %v1256 = vpop.f32.mrf.mxu0
      %v1257 = vadd.f32 0.0, %v1256
      %1258 = vdwg.mxu0
      %v1259 = vadd.f32 %v1118, %v1231
      %v1260 = vadd.f32 %v1119, %v1250
      %v1261 = vadd.f32 %v1120, %v1233
      %v1262 = vadd.f32 %v1121, %v1252
      %v1263 = vadd.f32 %v1122, %v1236
      %v1264 = vadd.f32 %v1123, %v1255
      %v1265 = vadd.f32 %v1124, %v1238
      %v1266 = vadd.f32 %v1125, %v1257
      %s1267 = scalar_lea.vmem %s2, 112
      %v1268 = vld [vmem:[%s1267] sm:$0xf]
      %v1269 = vld [vmem:[%s1267 + $0x4] sm:$0xf]
      %v1270 = vld [vmem:[%s1267 + $0x8] sm:$0xf]
      %v1271 = vld [vmem:[%s1267 + $0xc] sm:$0xf]
      %v1276 = vunpack.c.l.b16 %v1268
      %v1277 = vunpack.c.l.b16 %v1269
      %v1278 = vunpack.c.l.b16 %v1270
      %v1279 = vunpack.c.l.b16 %v1271
      %v1280 = vpack.c.b16 %v1277, %v1276
      %v1281 = vpack.c.b16 %v1279, %v1278
      %1282 = vrot.lane.b32.xlu0 %v529, 95
      %v1283 = vpop.permute.xlu0 %1282
      %1284 = vrot.lane.b32.xlu0 %v530, 95
      %v1285 = vpop.permute.xlu0 %1284
      %1286 = vrot.lane.b32.xlu0 %v531, 95
      %v1287 = vpop.permute.xlu0 %1286
      %1288 = vrot.lane.b32.xlu0 %v532, 95
      %v1289 = vpop.permute.xlu0 %1288
      %1290 = vrot.lane.b32.xlu0 %v533, 95
      %v1291 = vpop.permute.xlu0 %1290
      %1292 = vrot.lane.b32.xlu0 %v534, 95
      %v1293 = vpop.permute.xlu0 %1292
      %vm1294 = vcmask 777216
      %v1295 = vsel %vm1294, %v1283, %v1285
      %v1296 = vsel %vm1294, %v1285, %v1287
      %v1297 = vsel %vm1294, %v1289, %v1291
      %v1298 = vsel %vm1294, %v1291, %v1293
      %v1304 = vsel %vm433, %v1280, 0
      %v1307 = vsel %vm433, %v1281, 0
      %1309 = vmatpush.bf16.msra.mxu0 0
      %1310 = vmatpush.bf16.msra.mxu0 0
      %1311 = vmatpush.bf16.msra.mxu0 0
      %1312 = vmatpush.bf16.msra.mxu0 0
      %1313 = vmatpush.bf16.msra.mxu0 0
      %1314 = vmatpush.bf16.msra.mxu0 0
      %1315 = vmatpush.bf16.msra.mxu0 %v1297
      %1316 = vmatpush.bf16.msra.mxu0 %v1295
      %1317 = vmatmul.bf16.gmra.mxu0 %v1304
      %v1318 = vpop.f32.mrf.mxu0
      %v1319 = vadd.f32 0.0, %v1318
      %v1320 = vpop.f32.mrf.mxu0
      %v1321 = vadd.f32 0.0, %v1320
      %1322 = vmatmul.bf16.gmra.mxu0 %v1307
      %v1323 = vpop.f32.mrf.mxu0
      %v1324 = vadd.f32 0.0, %v1323
      %v1325 = vpop.f32.mrf.mxu0
      %v1326 = vadd.f32 0.0, %v1325
      %1327 = vdwg.mxu0
      %1328 = vmatpush.bf16.msra.mxu0 0
      %1329 = vmatpush.bf16.msra.mxu0 0
      %1330 = vmatpush.bf16.msra.mxu0 0
      %1331 = vmatpush.bf16.msra.mxu0 0
      %1332 = vmatpush.bf16.msra.mxu0 0
      %1333 = vmatpush.bf16.msra.mxu0 0
      %1334 = vmatpush.bf16.msra.mxu0 %v1298
      %1335 = vmatpush.bf16.msra.mxu0 %v1296
      %1336 = vmatmul.bf16.gmra.mxu0 %v1304
      %v1337 = vpop.f32.mrf.mxu0
      %v1338 = vadd.f32 0.0, %v1337
      %v1339 = vpop.f32.mrf.mxu0
      %v1340 = vadd.f32 0.0, %v1339
      %1341 = vmatmul.bf16.gmra.mxu0 %v1307
      %v1342 = vpop.f32.mrf.mxu0
      %v1343 = vadd.f32 0.0, %v1342
      %v1344 = vpop.f32.mrf.mxu0
      %v1345 = vadd.f32 0.0, %v1344
      %1346 = vdwg.mxu0
      %v1347 = vadd.f32 %v1259, %v1319
      %v1348 = vadd.f32 %v1260, %v1338
      %v1349 = vadd.f32 %v1261, %v1321
      %v1350 = vadd.f32 %v1262, %v1340
      %v1351 = vadd.f32 %v1263, %v1324
      %v1352 = vadd.f32 %v1264, %v1343
      %v1353 = vadd.f32 %v1265, %v1326
      %v1354 = vadd.f32 %v1266, %v1345
      %1355 = vrot.lane.b32.xlu0 %v613, 34
      %v1356 = vpop.permute.xlu0 %1355
      %v1357 = vrot.slane %v1356, 4
      %vm1358 = vcmask 277504
      %v1359 = vsel %vm1358, %v1357, %v1356
      %v1360 = vunpack.c.l.b16 %v1359
      %v1361 = vunpack.c.h.b16 %v1359
      %v1362 = vunpack.c.l.b16 0
      %v1363 = vunpack.c.h.b16 0
      %vm1364 = vcmp.ne.s32.totalorder %v1360, %v1362
      %vm1365 = vcmp.ne.s32.totalorder %v1361, %v1363
      %vm1366 = vmpackc.low %vm1365, %vm1364
      %v1367 = vunpack.c.l.b16 %v1357
      %v1368 = vunpack.c.h.b16 %v1357
      %v1369 = vunpack.c.l.b16 0
      %v1370 = vunpack.c.h.b16 0
      %vm1371 = vcmp.ne.s32.totalorder %v1367, %v1369
      %vm1372 = vcmp.ne.s32.totalorder %v1368, %v1370
      %vm1373 = vmpackc.low %vm1372, %vm1371
      %v1374 = vsel %vm1366, %v486, 0
      %v1375 = vsel %vm1373, %v487, 0
      %v1376 = vsel %vm1366, %v488, 0
      %v1377 = vsel %vm1373, %v489, 0
      %v1378 = vsel %vm1366, %v490, 0
      %v1379 = vsel %vm1373, %v491, 0
      %v1380 = vsel %vm1366, %v492, 0
      %v1381 = vsel %vm1373, %v493, 0
      %s1382 = scalar_lea.vmem %s2, 128
      %v1383 = vld [vmem:[%s1382] sm:$0xf]
      %v1384 = vld [vmem:[%s1382 + $0x4] sm:$0xf]
      %v1385 = vld [vmem:[%s1382 + $0x8] sm:$0xf]
      %v1386 = vld [vmem:[%s1382 + $0xc] sm:$0xf]
      %v1391 = vunpack.c.l.b16 %v1383
      %v1392 = vunpack.c.l.b16 %v1384
      %v1393 = vunpack.c.l.b16 %v1385
      %v1394 = vunpack.c.l.b16 %v1386
      %v1395 = vpack.c.b16 %v1392, %v1391
      %v1396 = vpack.c.b16 %v1394, %v1393
      %v1405 = vunpack.c.l.b16 %v1374
      %v1406 = vunpack.c.h.b16 %v1374
      %v1407 = vunpack.c.l.b16 %v1375
      %v1408 = vunpack.c.l.b16 %v1376
      %v1409 = vunpack.c.h.b16 %v1376
      %v1410 = vunpack.c.l.b16 %v1377
      %v1411 = vunpack.c.l.b16 %v1378
      %v1412 = vunpack.c.h.b16 %v1378
      %v1413 = vunpack.c.l.b16 %v1379
      %v1414 = vunpack.c.l.b16 %v1380
      %v1415 = vunpack.c.h.b16 %v1380
      %v1416 = vunpack.c.l.b16 %v1381
      %v1417 = vpack.c.b16 %v1408, %v1405
      %v1418 = vpack.c.b16 %v1409, %v1406
      %v1419 = vpack.c.b16 %v1410, %v1407
      %v1420 = vpack.c.b16 %v1414, %v1411
      %v1421 = vpack.c.b16 %v1415, %v1412
      %v1422 = vpack.c.b16 %v1416, %v1413
      %1423 = vrot.lane.b32.xlu0 %v1417, 94
      %v1424 = vpop.permute.xlu0 %1423
      %1425 = vrot.lane.b32.xlu0 %v1418, 94
      %v1426 = vpop.permute.xlu0 %1425
      %1427 = vrot.lane.b32.xlu0 %v1419, 94
      %v1428 = vpop.permute.xlu0 %1427
      %1429 = vrot.lane.b32.xlu0 %v1420, 94
      %v1430 = vpop.permute.xlu0 %1429
      %1431 = vrot.lane.b32.xlu0 %v1421, 94
      %v1432 = vpop.permute.xlu0 %1431
      %1433 = vrot.lane.b32.xlu0 %v1422, 94
      %v1434 = vpop.permute.xlu0 %1433
      %vm1435 = vcmask 769024
      %v1436 = vsel %vm1435, %v1424, %v1426
      %v1437 = vsel %vm1435, %v1426, %v1428
      %v1438 = vsel %vm1435, %v1430, %v1432
      %v1439 = vsel %vm1435, %v1432, %v1434
      %v1445 = vsel %vm433, %v1395, 0
      %v1448 = vsel %vm433, %v1396, 0
      %1450 = vmatpush.bf16.msra.mxu0 0
      %1451 = vmatpush.bf16.msra.mxu0 0
      %1452 = vmatpush.bf16.msra.mxu0 0
      %1453 = vmatpush.bf16.msra.mxu0 0
      %1454 = vmatpush.bf16.msra.mxu0 0
      %1455 = vmatpush.bf16.msra.mxu0 0
      %1456 = vmatpush.bf16.msra.mxu0 %v1438
      %1457 = vmatpush.bf16.msra.mxu0 %v1436
      %1458 = vmatmul.bf16.gmra.mxu0 %v1445
      %v1459 = vpop.f32.mrf.mxu0
      %v1460 = vadd.f32 0.0, %v1459
      %v1461 = vpop.f32.mrf.mxu0
      %v1462 = vadd.f32 0.0, %v1461
      %1463 = vmatmul.bf16.gmra.mxu0 %v1448
      %v1464 = vpop.f32.mrf.mxu0
      %v1465 = vadd.f32 0.0, %v1464
      %v1466 = vpop.f32.mrf.mxu0
      %v1467 = vadd.f32 0.0, %v1466
      %1468 = vdwg.mxu0
      %1469 = vmatpush.bf16.msra.mxu0 0
      %1470 = vmatpush.bf16.msra.mxu0 0
      %1471 = vmatpush.bf16.msra.mxu0 0
      %1472 = vmatpush.bf16.msra.mxu0 0
      %1473 = vmatpush.bf16.msra.mxu0 0
      %1474 = vmatpush.bf16.msra.mxu0 0
      %1475 = vmatpush.bf16.msra.mxu0 %v1439
      %1476 = vmatpush.bf16.msra.mxu0 %v1437
      %1477 = vmatmul.bf16.gmra.mxu0 %v1445
      %v1478 = vpop.f32.mrf.mxu0
      %v1479 = vadd.f32 0.0, %v1478
      %v1480 = vpop.f32.mrf.mxu0
      %v1481 = vadd.f32 0.0, %v1480
      %1482 = vmatmul.bf16.gmra.mxu0 %v1448
      %v1483 = vpop.f32.mrf.mxu0
      %v1484 = vadd.f32 0.0, %v1483
      %v1485 = vpop.f32.mrf.mxu0
      %v1486 = vadd.f32 0.0, %v1485
      %1487 = vdwg.mxu0
      %v1488 = vadd.f32 %v1347, %v1460
      %v1489 = vadd.f32 %v1348, %v1479
      %v1490 = vadd.f32 %v1349, %v1462
      %v1491 = vadd.f32 %v1350, %v1481
      %v1492 = vadd.f32 %v1351, %v1465
      %v1493 = vadd.f32 %v1352, %v1484
      %v1494 = vadd.f32 %v1353, %v1467
      %v1495 = vadd.f32 %v1354, %v1486
      %v1496 = vmax.f32 %v1488, 0.0
      %v1497 = vmax.f32 %v1489, 0.0
      %v1498 = vmax.f32 %v1490, 0.0
      %v1499 = vmax.f32 %v1491, 0.0
      %v1500 = vmax.f32 %v1492, 0.0
      %v1501 = vmax.f32 %v1493, 0.0
      %v1502 = vmax.f32 %v1494, 0.0
      %v1503 = vmax.f32 %v1495, 0.0
      %v1504 = vpack.c.bf16 %v1497, %v1496
      %v1505 = vpack.c.bf16 %v1499, %v1498
      %v1506 = vpack.c.bf16 %v1501, %v1500
      %v1507 = vpack.c.bf16 %v1503, %v1502
      %1512 = vrot.lane.b32.xlu0 %v1504, 17
      %v1513 = vpop.permute.xlu0 %1512
      %1514 = vrot.lane.b32.xlu0 %v1505, 17
      %v1515 = vpop.permute.xlu0 %1514
      %1516 = vrot.lane.b32.xlu0 %v1506, 17
      %v1517 = vpop.permute.xlu0 %1516
      %1518 = vrot.lane.b32.xlu0 %v1507, 17
      %v1519 = vpop.permute.xlu0 %1518
      %v1520 = vrot.slane %v1513, 4
      %v1521 = vrot.slane %v1515, 4
      %v1522 = vrot.slane %v1517, 4
      %v1523 = vrot.slane %v1519, 4
      %v1524 = vsel %vm338, %v1520, %v1513
      %v1525 = vsel %vm338, %v1521, %v1515
      %v1526 = vsel %vm338, %v1522, %v1517
      %v1527 = vsel %vm338, %v1523, %v1519
      %1536 = vst.msk [vmem:[#allocation2] sm:$0xff] %vm353, %v1524
      %1537 = vst.msk [vmem:[#allocation2 + $0x8] sm:$0xf] %vm284, %v1520
      %1538 = vst.msk [vmem:[#allocation2 + $0xc] sm:$0xff] %vm353, %v1525
      %1539 = vst.msk [vmem:[#allocation2 + $0x14] sm:$0xf] %vm284, %v1521
      %1540 = vst.msk [vmem:[#allocation2 + $0x18] sm:$0xff] %vm353, %v1526
      %1541 = vst.msk [vmem:[#allocation2 + $0x20] sm:$0xf] %vm284, %v1522
      %1542 = vst.msk [vmem:[#allocation2 + $0x24] sm:$0xff] %vm353, %v1527
      %1543 = vst.msk [vmem:[#allocation2 + $0x2c] sm:$0xf] %vm284, %v1523
      %v1544 = vld [vmem:[%s5] sm:$0xff]
      %v1545 = vld [vmem:[%s5 + $0x8] sm:$0xff]
      %v1546 = vld [vmem:[%s5 + $0x10] sm:$0xff]
      %v1547 = vld [vmem:[%s5 + $0x18] sm:$0xff]
      %1549 = vset.pattern.permute.xlu0 0
      %1550 = vperm.xlu0 %1549, %v1544
      %v1551 = vpop.permute.xlu0 %1550
      %1554 = vset.pattern.permute.xlu0 0
      %1555 = vperm.xlu0 %1554, %v1545
      %v1556 = vpop.permute.xlu0 %1555
      %1559 = vset.pattern.permute.xlu0 0
      %1560 = vperm.xlu0 %1559, %v1546
      %v1561 = vpop.permute.xlu0 %1560
      %1564 = vset.pattern.permute.xlu0 0
      %1565 = vperm.xlu0 %1564, %v1547
      %v1566 = vpop.permute.xlu0 %1565
      %v1568 = vld [vmem:[#allocation2] sm:$0xff]
      %v1569 = vld [vmem:[#allocation2 + $0xc] sm:$0xff]
      %v1570 = vld [vmem:[#allocation2 + $0x18] sm:$0xff]
      %v1571 = vld [vmem:[#allocation2 + $0x24] sm:$0xff]
      %v1572 = vsel %vm394, %v1568, 0
      %v1573 = vsel %vm394, %v1569, 0
      %v1574 = vsel %vm394, %v1570, 0
      %v1575 = vsel %vm394, %v1571, 0
      %v1576 = vld [vmem:[%s4] sm:$0xf]
      %v1577 = vld [vmem:[%s4 + $0x4] sm:$0xf]
      %v1578 = vld [vmem:[%s4 + $0x8] sm:$0xf]
      %v1579 = vld [vmem:[%s4 + $0xc] sm:$0xf]
      %v1584 = vunpack.c.l.b16 %v1576
      %v1585 = vunpack.c.l.b16 %v1577
      %v1586 = vunpack.c.l.b16 %v1578
      %v1587 = vunpack.c.l.b16 %v1579
      %v1588 = vpack.c.b16 %v1585, %v1584
      %v1589 = vpack.c.b16 %v1587, %v1586
      %v1594 = vunpack.c.l.b16 %v1572
      %v1595 = vunpack.c.h.b16 %v1572
      %v1596 = vunpack.c.l.b16 %v1573
      %v1597 = vunpack.c.h.b16 %v1573
      %v1598 = vunpack.c.l.b16 %v1574
      %v1599 = vunpack.c.h.b16 %v1574
      %v1600 = vunpack.c.l.b16 %v1575
      %v1601 = vunpack.c.h.b16 %v1575
      %v1602 = vpack.c.b16 %v1596, %v1594
      %v1603 = vpack.c.b16 %v1597, %v1595
      %v1604 = vpack.c.b16 %v1600, %v1598
      %v1605 = vpack.c.b16 %v1601, %v1599
      %v1611 = vsel %vm433, %v1588, 0
      %v1614 = vsel %vm433, %v1589, 0
      %1616 = vmatpush.bf16.msra.mxu0 0
      %1617 = vmatpush.bf16.msra.mxu0 0
      %1618 = vmatpush.bf16.msra.mxu0 0
      %1619 = vmatpush.bf16.msra.mxu0 0
      %1620 = vmatpush.bf16.msra.mxu0 0
      %1621 = vmatpush.bf16.msra.mxu0 0
      %1622 = vmatpush.bf16.msra.mxu0 %v1604
      %1623 = vmatpush.bf16.msra.mxu0 %v1602
      %1624 = vmatmul.bf16.gmra.mxu0 %v1611
      %v1625 = vpop.f32.mrf.mxu0
      %v1626 = vadd.f32 0.0, %v1625
      %v1627 = vpop.f32.mrf.mxu0
      %v1628 = vadd.f32 0.0, %v1627
      %1629 = vmatmul.bf16.gmra.mxu0 %v1614
      %v1630 = vpop.f32.mrf.mxu0
      %v1631 = vadd.f32 0.0, %v1630
      %v1632 = vpop.f32.mrf.mxu0
      %v1633 = vadd.f32 0.0, %v1632
      %1634 = vdwg.mxu0
      %1635 = vmatpush.bf16.msra.mxu0 0
      %1636 = vmatpush.bf16.msra.mxu0 0
      %1637 = vmatpush.bf16.msra.mxu0 0
      %1638 = vmatpush.bf16.msra.mxu0 0
      %1639 = vmatpush.bf16.msra.mxu0 0
      %1640 = vmatpush.bf16.msra.mxu0 0
      %1641 = vmatpush.bf16.msra.mxu0 %v1605
      %1642 = vmatpush.bf16.msra.mxu0 %v1603
      %1643 = vmatmul.bf16.gmra.mxu0 %v1611
      %v1644 = vpop.f32.mrf.mxu0
      %v1645 = vadd.f32 0.0, %v1644
      %v1646 = vpop.f32.mrf.mxu0
      %v1647 = vadd.f32 0.0, %v1646
      %1648 = vmatmul.bf16.gmra.mxu0 %v1614
      %v1649 = vpop.f32.mrf.mxu0
      %v1650 = vadd.f32 0.0, %v1649
      %v1651 = vpop.f32.mrf.mxu0
      %v1652 = vadd.f32 0.0, %v1651
      %1653 = vdwg.mxu0
      %v1654 = vadd.f32 %v1551, %v1626
      %v1655 = vadd.f32 %v1551, %v1645
      %v1656 = vadd.f32 %v1556, %v1628
      %v1657 = vadd.f32 %v1556, %v1647
      %v1658 = vadd.f32 %v1561, %v1631
      %v1659 = vadd.f32 %v1561, %v1650
      %v1660 = vadd.f32 %v1566, %v1633
      %v1661 = vadd.f32 %v1566, %v1652
      %v1662 = vld [vmem:[#allocation2] sm:$0xff]
      %v1663 = vld [vmem:[#allocation2 + $0x8] sm:$0xf]
      %v1664 = vld [vmem:[#allocation2 + $0xc] sm:$0xff]
      %v1665 = vld [vmem:[#allocation2 + $0x14] sm:$0xf]
      %v1666 = vld [vmem:[#allocation2 + $0x18] sm:$0xff]
      %v1667 = vld [vmem:[#allocation2 + $0x20] sm:$0xf]
      %v1668 = vld [vmem:[#allocation2 + $0x24] sm:$0xff]
      %v1669 = vld [vmem:[#allocation2 + $0x2c] sm:$0xf]
      %s1670 = scalar_lea.vmem %s4, 16
      %v1671 = vld [vmem:[%s1670] sm:$0xf]
      %v1672 = vld [vmem:[%s1670 + $0x4] sm:$0xf]
      %v1673 = vld [vmem:[%s1670 + $0x8] sm:$0xf]
      %v1674 = vld [vmem:[%s1670 + $0xc] sm:$0xf]
      %v1679 = vunpack.c.l.b16 %v1671
      %v1680 = vunpack.c.l.b16 %v1672
      %v1681 = vunpack.c.l.b16 %v1673
      %v1682 = vunpack.c.l.b16 %v1674
      %v1683 = vpack.c.b16 %v1680, %v1679
      %v1684 = vpack.c.b16 %v1682, %v1681
      %v1693 = vunpack.c.l.b16 %v1662
      %v1694 = vunpack.c.h.b16 %v1662
      %v1695 = vunpack.c.l.b16 %v1663
      %v1696 = vunpack.c.l.b16 %v1664
      %v1697 = vunpack.c.h.b16 %v1664
      %v1698 = vunpack.c.l.b16 %v1665
      %v1699 = vunpack.c.l.b16 %v1666
      %v1700 = vunpack.c.h.b16 %v1666
      %v1701 = vunpack.c.l.b16 %v1667
      %v1702 = vunpack.c.l.b16 %v1668
      %v1703 = vunpack.c.h.b16 %v1668
      %v1704 = vunpack.c.l.b16 %v1669
      %v1705 = vpack.c.b16 %v1696, %v1693
      %v1706 = vpack.c.b16 %v1697, %v1694
      %v1707 = vpack.c.b16 %v1698, %v1695
      %v1708 = vpack.c.b16 %v1702, %v1699
      %v1709 = vpack.c.b16 %v1703, %v1700
      %v1710 = vpack.c.b16 %v1704, %v1701
      %1711 = vrot.lane.b32.xlu0 %v1705, 127
      %v1712 = vpop.permute.xlu0 %1711
      %1713 = vrot.lane.b32.xlu0 %v1706, 127
      %v1714 = vpop.permute.xlu0 %1713
      %1715 = vrot.lane.b32.xlu0 %v1707, 127
      %v1716 = vpop.permute.xlu0 %1715
      %1717 = vrot.lane.b32.xlu0 %v1708, 127
      %v1718 = vpop.permute.xlu0 %1717
      %1719 = vrot.lane.b32.xlu0 %v1709, 127
      %v1720 = vpop.permute.xlu0 %1719
      %1721 = vrot.lane.b32.xlu0 %v1710, 127
      %v1722 = vpop.permute.xlu0 %1721
      %v1723 = vsel %vm547, %v1712, %v1714
      %v1724 = vsel %vm547, %v1714, %v1716
      %v1725 = vsel %vm547, %v1718, %v1720
      %v1726 = vsel %vm547, %v1720, %v1722
      %v1732 = vsel %vm433, %v1683, 0
      %v1735 = vsel %vm433, %v1684, 0
      %1737 = vmatpush.bf16.msra.mxu0 0
      %1738 = vmatpush.bf16.msra.mxu0 0
      %1739 = vmatpush.bf16.msra.mxu0 0
      %1740 = vmatpush.bf16.msra.mxu0 0
      %1741 = vmatpush.bf16.msra.mxu0 0
      %1742 = vmatpush.bf16.msra.mxu0 0
      %1743 = vmatpush.bf16.msra.mxu0 %v1725
      %1744 = vmatpush.bf16.msra.mxu0 %v1723
      %1745 = vmatmul.bf16.gmra.mxu0 %v1732
      %v1746 = vpop.f32.mrf.mxu0
      %v1747 = vadd.f32 0.0, %v1746
      %v1748 = vpop.f32.mrf.mxu0
      %v1749 = vadd.f32 0.0, %v1748
      %1750 = vmatmul.bf16.gmra.mxu0 %v1735
      %v1751 = vpop.f32.mrf.mxu0
      %v1752 = vadd.f32 0.0, %v1751
      %v1753 = vpop.f32.mrf.mxu0
      %v1754 = vadd.f32 0.0, %v1753
      %1755 = vdwg.mxu0
      %1756 = vmatpush.bf16.msra.mxu0 0
      %1757 = vmatpush.bf16.msra.mxu0 0
      %1758 = vmatpush.bf16.msra.mxu0 0
      %1759 = vmatpush.bf16.msra.mxu0 0
      %1760 = vmatpush.bf16.msra.mxu0 0
      %1761 = vmatpush.bf16.msra.mxu0 0
      %1762 = vmatpush.bf16.msra.mxu0 %v1726
      %1763 = vmatpush.bf16.msra.mxu0 %v1724
      %1764 = vmatmul.bf16.gmra.mxu0 %v1732
      %v1765 = vpop.f32.mrf.mxu0
      %v1766 = vadd.f32 0.0, %v1765
      %v1767 = vpop.f32.mrf.mxu0
      %v1768 = vadd.f32 0.0, %v1767
      %1769 = vmatmul.bf16.gmra.mxu0 %v1735
      %v1770 = vpop.f32.mrf.mxu0
      %v1771 = vadd.f32 0.0, %v1770
      %v1772 = vpop.f32.mrf.mxu0
      %v1773 = vadd.f32 0.0, %v1772
      %1774 = vdwg.mxu0
      %v1775 = vadd.f32 %v1654, %v1747
      %v1776 = vadd.f32 %v1655, %v1766
      %v1777 = vadd.f32 %v1656, %v1749
      %v1778 = vadd.f32 %v1657, %v1768
      %v1779 = vadd.f32 %v1658, %v1752
      %v1780 = vadd.f32 %v1659, %v1771
      %v1781 = vadd.f32 %v1660, %v1754
      %v1782 = vadd.f32 %v1661, %v1773
      %v1783 = vsel %vm625, %v1662, 0
      %v1784 = vsel %vm632, %v1663, 0
      %v1785 = vsel %vm625, %v1664, 0
      %v1786 = vsel %vm632, %v1665, 0
      %v1787 = vsel %vm625, %v1666, 0
      %v1788 = vsel %vm632, %v1667, 0
      %v1789 = vsel %vm625, %v1668, 0
      %v1790 = vsel %vm632, %v1669, 0
      %s1791 = scalar_lea.vmem %s4, 32
      %v1792 = vld [vmem:[%s1791] sm:$0xf]
      %v1793 = vld [vmem:[%s1791 + $0x4] sm:$0xf]
      %v1794 = vld [vmem:[%s1791 + $0x8] sm:$0xf]
      %v1795 = vld [vmem:[%s1791 + $0xc] sm:$0xf]
      %v1800 = vunpack.c.l.b16 %v1792
      %v1801 = vunpack.c.l.b16 %v1793
      %v1802 = vunpack.c.l.b16 %v1794
      %v1803 = vunpack.c.l.b16 %v1795
      %v1804 = vpack.c.b16 %v1801, %v1800
      %v1805 = vpack.c.b16 %v1803, %v1802
      %v1814 = vunpack.c.l.b16 %v1783
      %v1815 = vunpack.c.h.b16 %v1783
      %v1816 = vunpack.c.l.b16 %v1784
      %v1817 = vunpack.c.l.b16 %v1785
      %v1818 = vunpack.c.h.b16 %v1785
      %v1819 = vunpack.c.l.b16 %v1786
      %v1820 = vunpack.c.l.b16 %v1787
      %v1821 = vunpack.c.h.b16 %v1787
      %v1822 = vunpack.c.l.b16 %v1788
      %v1823 = vunpack.c.l.b16 %v1789
      %v1824 = vunpack.c.h.b16 %v1789
      %v1825 = vunpack.c.l.b16 %v1790
      %v1826 = vpack.c.b16 %v1817, %v1814
      %v1827 = vpack.c.b16 %v1818, %v1815
      %v1828 = vpack.c.b16 %v1819, %v1816
      %v1829 = vpack.c.b16 %v1823, %v1820
      %v1830 = vpack.c.b16 %v1824, %v1821
      %v1831 = vpack.c.b16 %v1825, %v1822
      %1832 = vrot.lane.b32.xlu0 %v1826, 126
      %v1833 = vpop.permute.xlu0 %1832
      %1834 = vrot.lane.b32.xlu0 %v1827, 126
      %v1835 = vpop.permute.xlu0 %1834
      %1836 = vrot.lane.b32.xlu0 %v1828, 126
      %v1837 = vpop.permute.xlu0 %1836
      %1838 = vrot.lane.b32.xlu0 %v1829, 126
      %v1839 = vpop.permute.xlu0 %1838
      %1840 = vrot.lane.b32.xlu0 %v1830, 126
      %v1841 = vpop.permute.xlu0 %1840
      %1842 = vrot.lane.b32.xlu0 %v1831, 126
      %v1843 = vpop.permute.xlu0 %1842
      %v1844 = vsel %vm694, %v1833, %v1835
      %v1845 = vsel %vm694, %v1835, %v1837
      %v1846 = vsel %vm694, %v1839, %v1841
      %v1847 = vsel %vm694, %v1841, %v1843
      %v1853 = vsel %vm433, %v1804, 0
      %v1856 = vsel %vm433, %v1805, 0
      %1858 = vmatpush.bf16.msra.mxu0 0
      %1859 = vmatpush.bf16.msra.mxu0 0
      %1860 = vmatpush.bf16.msra.mxu0 0
      %1861 = vmatpush.bf16.msra.mxu0 0
      %1862 = vmatpush.bf16.msra.mxu0 0
      %1863 = vmatpush.bf16.msra.mxu0 0
      %1864 = vmatpush.bf16.msra.mxu0 %v1846
      %1865 = vmatpush.bf16.msra.mxu0 %v1844
      %1866 = vmatmul.bf16.gmra.mxu0 %v1853
      %v1867 = vpop.f32.mrf.mxu0
      %v1868 = vadd.f32 0.0, %v1867
      %v1869 = vpop.f32.mrf.mxu0
      %v1870 = vadd.f32 0.0, %v1869
      %1871 = vmatmul.bf16.gmra.mxu0 %v1856
      %v1872 = vpop.f32.mrf.mxu0
      %v1873 = vadd.f32 0.0, %v1872
      %v1874 = vpop.f32.mrf.mxu0
      %v1875 = vadd.f32 0.0, %v1874
      %1876 = vdwg.mxu0
      %1877 = vmatpush.bf16.msra.mxu0 0
      %1878 = vmatpush.bf16.msra.mxu0 0
      %1879 = vmatpush.bf16.msra.mxu0 0
      %1880 = vmatpush.bf16.msra.mxu0 0
      %1881 = vmatpush.bf16.msra.mxu0 0
      %1882 = vmatpush.bf16.msra.mxu0 0
      %1883 = vmatpush.bf16.msra.mxu0 %v1847
      %1884 = vmatpush.bf16.msra.mxu0 %v1845
      %1885 = vmatmul.bf16.gmra.mxu0 %v1853
      %v1886 = vpop.f32.mrf.mxu0
      %v1887 = vadd.f32 0.0, %v1886
      %v1888 = vpop.f32.mrf.mxu0
      %v1889 = vadd.f32 0.0, %v1888
      %1890 = vmatmul.bf16.gmra.mxu0 %v1856
      %v1891 = vpop.f32.mrf.mxu0
      %v1892 = vadd.f32 0.0, %v1891
      %v1893 = vpop.f32.mrf.mxu0
      %v1894 = vadd.f32 0.0, %v1893
      %1895 = vdwg.mxu0
      %v1896 = vadd.f32 %v1775, %v1868
      %v1897 = vadd.f32 %v1776, %v1887
      %v1898 = vadd.f32 %v1777, %v1870
      %v1899 = vadd.f32 %v1778, %v1889
      %v1900 = vadd.f32 %v1779, %v1873
      %v1901 = vadd.f32 %v1780, %v1892
      %v1902 = vadd.f32 %v1781, %v1875
      %v1903 = vadd.f32 %v1782, %v1894
      %v1904 = vsel %vm767, %v1662, 0
      %v1905 = vsel %vm774, %v1663, 0
      %v1906 = vsel %vm767, %v1664, 0
      %v1907 = vsel %vm774, %v1665, 0
      %v1908 = vsel %vm767, %v1666, 0
      %v1909 = vsel %vm774, %v1667, 0
      %v1910 = vsel %vm767, %v1668, 0
      %v1911 = vsel %vm774, %v1669, 0
      %s1912 = scalar_lea.vmem %s4, 48
      %v1913 = vld [vmem:[%s1912] sm:$0xf]
      %v1914 = vld [vmem:[%s1912 + $0x4] sm:$0xf]
      %v1915 = vld [vmem:[%s1912 + $0x8] sm:$0xf]
      %v1916 = vld [vmem:[%s1912 + $0xc] sm:$0xf]
      %v1921 = vunpack.c.l.b16 %v1913
      %v1922 = vunpack.c.l.b16 %v1914
      %v1923 = vunpack.c.l.b16 %v1915
      %v1924 = vunpack.c.l.b16 %v1916
      %v1925 = vpack.c.b16 %v1922, %v1921
      %v1926 = vpack.c.b16 %v1924, %v1923
      %v1935 = vunpack.c.l.b16 %v1904
      %v1936 = vunpack.c.h.b16 %v1904
      %v1937 = vunpack.c.l.b16 %v1905
      %v1938 = vunpack.c.l.b16 %v1906
      %v1939 = vunpack.c.h.b16 %v1906
      %v1940 = vunpack.c.l.b16 %v1907
      %v1941 = vunpack.c.l.b16 %v1908
      %v1942 = vunpack.c.h.b16 %v1908
      %v1943 = vunpack.c.l.b16 %v1909
      %v1944 = vunpack.c.l.b16 %v1910
      %v1945 = vunpack.c.h.b16 %v1910
      %v1946 = vunpack.c.l.b16 %v1911
      %v1947 = vpack.c.b16 %v1938, %v1935
      %v1948 = vpack.c.b16 %v1939, %v1936
      %v1949 = vpack.c.b16 %v1940, %v1937
      %v1950 = vpack.c.b16 %v1944, %v1941
      %v1951 = vpack.c.b16 %v1945, %v1942
      %v1952 = vpack.c.b16 %v1946, %v1943
      %1953 = vrot.lane.b32.xlu0 %v1947, 112
      %v1954 = vpop.permute.xlu0 %1953
      %1955 = vrot.lane.b32.xlu0 %v1948, 112
      %v1956 = vpop.permute.xlu0 %1955
      %1957 = vrot.lane.b32.xlu0 %v1949, 112
      %v1958 = vpop.permute.xlu0 %1957
      %1959 = vrot.lane.b32.xlu0 %v1950, 112
      %v1960 = vpop.permute.xlu0 %1959
      %1961 = vrot.lane.b32.xlu0 %v1951, 112
      %v1962 = vpop.permute.xlu0 %1961
      %1963 = vrot.lane.b32.xlu0 %v1952, 112
      %v1964 = vpop.permute.xlu0 %1963
      %v1965 = vsel %vm836, %v1954, %v1956
      %v1966 = vsel %vm836, %v1956, %v1958
      %v1967 = vsel %vm836, %v1960, %v1962
      %v1968 = vsel %vm836, %v1962, %v1964
      %v1974 = vsel %vm433, %v1925, 0
      %v1977 = vsel %vm433, %v1926, 0
      %1979 = vmatpush.bf16.msra.mxu0 0
      %1980 = vmatpush.bf16.msra.mxu0 0
      %1981 = vmatpush.bf16.msra.mxu0 0
      %1982 = vmatpush.bf16.msra.mxu0 0
      %1983 = vmatpush.bf16.msra.mxu0 0
      %1984 = vmatpush.bf16.msra.mxu0 0
      %1985 = vmatpush.bf16.msra.mxu0 %v1967
      %1986 = vmatpush.bf16.msra.mxu0 %v1965
      %1987 = vmatmul.bf16.gmra.mxu0 %v1974
      %v1988 = vpop.f32.mrf.mxu0
      %v1989 = vadd.f32 0.0, %v1988
      %v1990 = vpop.f32.mrf.mxu0
      %v1991 = vadd.f32 0.0, %v1990
      %1992 = vmatmul.bf16.gmra.mxu0 %v1977
      %v1993 = vpop.f32.mrf.mxu0
      %v1994 = vadd.f32 0.0, %v1993
      %v1995 = vpop.f32.mrf.mxu0
      %v1996 = vadd.f32 0.0, %v1995
      %1997 = vdwg.mxu0
      %1998 = vmatpush.bf16.msra.mxu0 0
      %1999 = vmatpush.bf16.msra.mxu0 0
      %2000 = vmatpush.bf16.msra.mxu0 0
      %2001 = vmatpush.bf16.msra.mxu0 0
      %2002 = vmatpush.bf16.msra.mxu0 0
      %2003 = vmatpush.bf16.msra.mxu0 0
      %2004 = vmatpush.bf16.msra.mxu0 %v1968
      %2005 = vmatpush.bf16.msra.mxu0 %v1966
      %2006 = vmatmul.bf16.gmra.mxu0 %v1974
      %v2007 = vpop.f32.mrf.mxu0
      %v2008 = vadd.f32 0.0, %v2007
      %v2009 = vpop.f32.mrf.mxu0
      %v2010 = vadd.f32 0.0, %v2009
      %2011 = vmatmul.bf16.gmra.mxu0 %v1977
      %v2012 = vpop.f32.mrf.mxu0
      %v2013 = vadd.f32 0.0, %v2012
      %v2014 = vpop.f32.mrf.mxu0
      %v2015 = vadd.f32 0.0, %v2014
      %2016 = vdwg.mxu0
      %v2017 = vadd.f32 %v1896, %v1989
      %v2018 = vadd.f32 %v1897, %v2008
      %v2019 = vadd.f32 %v1898, %v1991
      %v2020 = vadd.f32 %v1899, %v2010
      %v2021 = vadd.f32 %v1900, %v1994
      %v2022 = vadd.f32 %v1901, %v2013
      %v2023 = vadd.f32 %v1902, %v1996
      %v2024 = vadd.f32 %v1903, %v2015
      %s2025 = scalar_lea.vmem %s4, 64
      %v2026 = vld [vmem:[%s2025] sm:$0xf]
      %v2027 = vld [vmem:[%s2025 + $0x4] sm:$0xf]
      %v2028 = vld [vmem:[%s2025 + $0x8] sm:$0xf]
      %v2029 = vld [vmem:[%s2025 + $0xc] sm:$0xf]
      %v2034 = vunpack.c.l.b16 %v2026
      %v2035 = vunpack.c.l.b16 %v2027
      %v2036 = vunpack.c.l.b16 %v2028
      %v2037 = vunpack.c.l.b16 %v2029
      %v2038 = vpack.c.b16 %v2035, %v2034
      %v2039 = vpack.c.b16 %v2037, %v2036
      %2040 = vrot.lane.b32.xlu0 %v1705, 111
      %v2041 = vpop.permute.xlu0 %2040
      %2042 = vrot.lane.b32.xlu0 %v1706, 111
      %v2043 = vpop.permute.xlu0 %2042
      %2044 = vrot.lane.b32.xlu0 %v1707, 111
      %v2045 = vpop.permute.xlu0 %2044
      %2046 = vrot.lane.b32.xlu0 %v1708, 111
      %v2047 = vpop.permute.xlu0 %2046
      %2048 = vrot.lane.b32.xlu0 %v1709, 111
      %v2049 = vpop.permute.xlu0 %2048
      %2050 = vrot.lane.b32.xlu0 %v1710, 111
      %v2051 = vpop.permute.xlu0 %2050
      %v2052 = vsel %vm924, %v2041, %v2043
      %v2053 = vsel %vm924, %v2043, %v2045
      %v2054 = vsel %vm924, %v2047, %v2049
      %v2055 = vsel %vm924, %v2049, %v2051
      %v2061 = vsel %vm433, %v2038, 0
      %v2064 = vsel %vm433, %v2039, 0
      %2066 = vmatpush.bf16.msra.mxu0 0
      %2067 = vmatpush.bf16.msra.mxu0 0
      %2068 = vmatpush.bf16.msra.mxu0 0
      %2069 = vmatpush.bf16.msra.mxu0 0
      %2070 = vmatpush.bf16.msra.mxu0 0
      %2071 = vmatpush.bf16.msra.mxu0 0
      %2072 = vmatpush.bf16.msra.mxu0 %v2054
      %2073 = vmatpush.bf16.msra.mxu0 %v2052
      %2074 = vmatmul.bf16.gmra.mxu0 %v2061
      %v2075 = vpop.f32.mrf.mxu0
      %v2076 = vadd.f32 0.0, %v2075
      %v2077 = vpop.f32.mrf.mxu0
      %v2078 = vadd.f32 0.0, %v2077
      %2079 = vmatmul.bf16.gmra.mxu0 %v2064
      %v2080 = vpop.f32.mrf.mxu0
      %v2081 = vadd.f32 0.0, %v2080
      %v2082 = vpop.f32.mrf.mxu0
      %v2083 = vadd.f32 0.0, %v2082
      %2084 = vdwg.mxu0
      %2085 = vmatpush.bf16.msra.mxu0 0
      %2086 = vmatpush.bf16.msra.mxu0 0
      %2087 = vmatpush.bf16.msra.mxu0 0
      %2088 = vmatpush.bf16.msra.mxu0 0
      %2089 = vmatpush.bf16.msra.mxu0 0
      %2090 = vmatpush.bf16.msra.mxu0 0
      %2091 = vmatpush.bf16.msra.mxu0 %v2055
      %2092 = vmatpush.bf16.msra.mxu0 %v2053
      %2093 = vmatmul.bf16.gmra.mxu0 %v2061
      %v2094 = vpop.f32.mrf.mxu0
      %v2095 = vadd.f32 0.0, %v2094
      %v2096 = vpop.f32.mrf.mxu0
      %v2097 = vadd.f32 0.0, %v2096
      %2098 = vmatmul.bf16.gmra.mxu0 %v2064
      %v2099 = vpop.f32.mrf.mxu0
      %v2100 = vadd.f32 0.0, %v2099
      %v2101 = vpop.f32.mrf.mxu0
      %v2102 = vadd.f32 0.0, %v2101
      %2103 = vdwg.mxu0
      %v2104 = vadd.f32 %v2017, %v2076
      %v2105 = vadd.f32 %v2018, %v2095
      %v2106 = vadd.f32 %v2019, %v2078
      %v2107 = vadd.f32 %v2020, %v2097
      %v2108 = vadd.f32 %v2021, %v2081
      %v2109 = vadd.f32 %v2022, %v2100
      %v2110 = vadd.f32 %v2023, %v2083
      %v2111 = vadd.f32 %v2024, %v2102
      %v2112 = vsel %vm996, %v1662, 0
      %v2113 = vsel %vm1003, %v1663, 0
      %v2114 = vsel %vm996, %v1664, 0
      %v2115 = vsel %vm1003, %v1665, 0
      %v2116 = vsel %vm996, %v1666, 0
      %v2117 = vsel %vm1003, %v1667, 0
      %v2118 = vsel %vm996, %v1668, 0
      %v2119 = vsel %vm1003, %v1669, 0
      %s2120 = scalar_lea.vmem %s4, 80
      %v2121 = vld [vmem:[%s2120] sm:$0xf]
      %v2122 = vld [vmem:[%s2120 + $0x4] sm:$0xf]
      %v2123 = vld [vmem:[%s2120 + $0x8] sm:$0xf]
      %v2124 = vld [vmem:[%s2120 + $0xc] sm:$0xf]
      %v2129 = vunpack.c.l.b16 %v2121
      %v2130 = vunpack.c.l.b16 %v2122
      %v2131 = vunpack.c.l.b16 %v2123
      %v2132 = vunpack.c.l.b16 %v2124
      %v2133 = vpack.c.b16 %v2130, %v2129
      %v2134 = vpack.c.b16 %v2132, %v2131
      %v2143 = vunpack.c.l.b16 %v2112
      %v2144 = vunpack.c.h.b16 %v2112
      %v2145 = vunpack.c.l.b16 %v2113
      %v2146 = vunpack.c.l.b16 %v2114
      %v2147 = vunpack.c.h.b16 %v2114
      %v2148 = vunpack.c.l.b16 %v2115
      %v2149 = vunpack.c.l.b16 %v2116
      %v2150 = vunpack.c.h.b16 %v2116
      %v2151 = vunpack.c.l.b16 %v2117
      %v2152 = vunpack.c.l.b16 %v2118
      %v2153 = vunpack.c.h.b16 %v2118
      %v2154 = vunpack.c.l.b16 %v2119
      %v2155 = vpack.c.b16 %v2146, %v2143
      %v2156 = vpack.c.b16 %v2147, %v2144
      %v2157 = vpack.c.b16 %v2148, %v2145
      %v2158 = vpack.c.b16 %v2152, %v2149
      %v2159 = vpack.c.b16 %v2153, %v2150
      %v2160 = vpack.c.b16 %v2154, %v2151
      %2161 = vrot.lane.b32.xlu0 %v2155, 110
      %v2162 = vpop.permute.xlu0 %2161
      %2163 = vrot.lane.b32.xlu0 %v2156, 110
      %v2164 = vpop.permute.xlu0 %2163
      %2165 = vrot.lane.b32.xlu0 %v2157, 110
      %v2166 = vpop.permute.xlu0 %2165
      %2167 = vrot.lane.b32.xlu0 %v2158, 110
      %v2168 = vpop.permute.xlu0 %2167
      %2169 = vrot.lane.b32.xlu0 %v2159, 110
      %v2170 = vpop.permute.xlu0 %2169
      %2171 = vrot.lane.b32.xlu0 %v2160, 110
      %v2172 = vpop.permute.xlu0 %2171
      %v2173 = vsel %vm1065, %v2162, %v2164
      %v2174 = vsel %vm1065, %v2164, %v2166
      %v2175 = vsel %vm1065, %v2168, %v2170
      %v2176 = vsel %vm1065, %v2170, %v2172
      %v2182 = vsel %vm433, %v2133, 0
      %v2185 = vsel %vm433, %v2134, 0
      %2187 = vmatpush.bf16.msra.mxu0 0
      %2188 = vmatpush.bf16.msra.mxu0 0
      %2189 = vmatpush.bf16.msra.mxu0 0
      %2190 = vmatpush.bf16.msra.mxu0 0
      %2191 = vmatpush.bf16.msra.mxu0 0
      %2192 = vmatpush.bf16.msra.mxu0 0
      %2193 = vmatpush.bf16.msra.mxu0 %v2175
      %2194 = vmatpush.bf16.msra.mxu0 %v2173
      %2195 = vmatmul.bf16.gmra.mxu0 %v2182
      %v2196 = vpop.f32.mrf.mxu0
      %v2197 = vadd.f32 0.0, %v2196
      %v2198 = vpop.f32.mrf.mxu0
      %v2199 = vadd.f32 0.0, %v2198
      %2200 = vmatmul.bf16.gmra.mxu0 %v2185
      %v2201 = vpop.f32.mrf.mxu0
      %v2202 = vadd.f32 0.0, %v2201
      %v2203 = vpop.f32.mrf.mxu0
      %v2204 = vadd.f32 0.0, %v2203
      %2205 = vdwg.mxu0
      %2206 = vmatpush.bf16.msra.mxu0 0
      %2207 = vmatpush.bf16.msra.mxu0 0
      %2208 = vmatpush.bf16.msra.mxu0 0
      %2209 = vmatpush.bf16.msra.mxu0 0
      %2210 = vmatpush.bf16.msra.mxu0 0
      %2211 = vmatpush.bf16.msra.mxu0 0
      %2212 = vmatpush.bf16.msra.mxu0 %v2176
      %2213 = vmatpush.bf16.msra.mxu0 %v2174
      %2214 = vmatmul.bf16.gmra.mxu0 %v2182
      %v2215 = vpop.f32.mrf.mxu0
      %v2216 = vadd.f32 0.0, %v2215
      %v2217 = vpop.f32.mrf.mxu0
      %v2218 = vadd.f32 0.0, %v2217
      %2219 = vmatmul.bf16.gmra.mxu0 %v2185
      %v2220 = vpop.f32.mrf.mxu0
      %v2221 = vadd.f32 0.0, %v2220
      %v2222 = vpop.f32.mrf.mxu0
      %v2223 = vadd.f32 0.0, %v2222
      %2224 = vdwg.mxu0
      %v2225 = vadd.f32 %v2104, %v2197
      %v2226 = vadd.f32 %v2105, %v2216
      %v2227 = vadd.f32 %v2106, %v2199
      %v2228 = vadd.f32 %v2107, %v2218
      %v2229 = vadd.f32 %v2108, %v2202
      %v2230 = vadd.f32 %v2109, %v2221
      %v2231 = vadd.f32 %v2110, %v2204
      %v2232 = vadd.f32 %v2111, %v2223
      %v2233 = vsel %vm1137, %v1662, 0
      %v2234 = vsel %vm1144, %v1663, 0
      %v2235 = vsel %vm1137, %v1664, 0
      %v2236 = vsel %vm1144, %v1665, 0
      %v2237 = vsel %vm1137, %v1666, 0
      %v2238 = vsel %vm1144, %v1667, 0
      %v2239 = vsel %vm1137, %v1668, 0
      %v2240 = vsel %vm1144, %v1669, 0
      %s2241 = scalar_lea.vmem %s4, 96
      %v2242 = vld [vmem:[%s2241] sm:$0xf]
      %v2243 = vld [vmem:[%s2241 + $0x4] sm:$0xf]
      %v2244 = vld [vmem:[%s2241 + $0x8] sm:$0xf]
      %v2245 = vld [vmem:[%s2241 + $0xc] sm:$0xf]
      %v2250 = vunpack.c.l.b16 %v2242
      %v2251 = vunpack.c.l.b16 %v2243
      %v2252 = vunpack.c.l.b16 %v2244
      %v2253 = vunpack.c.l.b16 %v2245
      %v2254 = vpack.c.b16 %v2251, %v2250
      %v2255 = vpack.c.b16 %v2253, %v2252
      %v2264 = vunpack.c.l.b16 %v2233
      %v2265 = vunpack.c.h.b16 %v2233
      %v2266 = vunpack.c.l.b16 %v2234
      %v2267 = vunpack.c.l.b16 %v2235
      %v2268 = vunpack.c.h.b16 %v2235
      %v2269 = vunpack.c.l.b16 %v2236
      %v2270 = vunpack.c.l.b16 %v2237
      %v2271 = vunpack.c.h.b16 %v2237
      %v2272 = vunpack.c.l.b16 %v2238
      %v2273 = vunpack.c.l.b16 %v2239
      %v2274 = vunpack.c.h.b16 %v2239
      %v2275 = vunpack.c.l.b16 %v2240
      %v2276 = vpack.c.b16 %v2267, %v2264
      %v2277 = vpack.c.b16 %v2268, %v2265
      %v2278 = vpack.c.b16 %v2269, %v2266
      %v2279 = vpack.c.b16 %v2273, %v2270
      %v2280 = vpack.c.b16 %v2274, %v2271
      %v2281 = vpack.c.b16 %v2275, %v2272
      %2282 = vrot.lane.b32.xlu0 %v2276, 96
      %v2283 = vpop.permute.xlu0 %2282
      %2284 = vrot.lane.b32.xlu0 %v2277, 96
      %v2285 = vpop.permute.xlu0 %2284
      %2286 = vrot.lane.b32.xlu0 %v2278, 96
      %v2287 = vpop.permute.xlu0 %2286
      %2288 = vrot.lane.b32.xlu0 %v2279, 96
      %v2289 = vpop.permute.xlu0 %2288
      %2290 = vrot.lane.b32.xlu0 %v2280, 96
      %v2291 = vpop.permute.xlu0 %2290
      %2292 = vrot.lane.b32.xlu0 %v2281, 96
      %v2293 = vpop.permute.xlu0 %2292
      %v2294 = vsel %vm1206, %v2283, %v2285
      %v2295 = vsel %vm1206, %v2285, %v2287
      %v2296 = vsel %vm1206, %v2289, %v2291
      %v2297 = vsel %vm1206, %v2291, %v2293
      %v2303 = vsel %vm433, %v2254, 0
      %v2306 = vsel %vm433, %v2255, 0
      %2308 = vmatpush.bf16.msra.mxu0 0
      %2309 = vmatpush.bf16.msra.mxu0 0
      %2310 = vmatpush.bf16.msra.mxu0 0
      %2311 = vmatpush.bf16.msra.mxu0 0
      %2312 = vmatpush.bf16.msra.mxu0 0
      %2313 = vmatpush.bf16.msra.mxu0 0
      %2314 = vmatpush.bf16.msra.mxu0 %v2296
      %2315 = vmatpush.bf16.msra.mxu0 %v2294
      %2316 = vmatmul.bf16.gmra.mxu0 %v2303
      %v2317 = vpop.f32.mrf.mxu0
      %v2318 = vadd.f32 0.0, %v2317
      %v2319 = vpop.f32.mrf.mxu0
      %v2320 = vadd.f32 0.0, %v2319
      %2321 = vmatmul.bf16.gmra.mxu0 %v2306
      %v2322 = vpop.f32.mrf.mxu0
      %v2323 = vadd.f32 0.0, %v2322
      %v2324 = vpop.f32.mrf.mxu0
      %v2325 = vadd.f32 0.0, %v2324
      %2326 = vdwg.mxu0
      %2327 = vmatpush.bf16.msra.mxu0 0
      %2328 = vmatpush.bf16.msra.mxu0 0
      %2329 = vmatpush.bf16.msra.mxu0 0
      %2330 = vmatpush.bf16.msra.mxu0 0
      %2331 = vmatpush.bf16.msra.mxu0 0
      %2332 = vmatpush.bf16.msra.mxu0 0
      %2333 = vmatpush.bf16.msra.mxu0 %v2297
      %2334 = vmatpush.bf16.msra.mxu0 %v2295
      %2335 = vmatmul.bf16.gmra.mxu0 %v2303
      %v2336 = vpop.f32.mrf.mxu0
      %v2337 = vadd.f32 0.0, %v2336
      %v2338 = vpop.f32.mrf.mxu0
      %v2339 = vadd.f32 0.0, %v2338
      %2340 = vmatmul.bf16.gmra.mxu0 %v2306
      %v2341 = vpop.f32.mrf.mxu0
      %v2342 = vadd.f32 0.0, %v2341
      %v2343 = vpop.f32.mrf.mxu0
      %v2344 = vadd.f32 0.0, %v2343
      %2345 = vdwg.mxu0
      %v2346 = vadd.f32 %v2225, %v2318
      %v2347 = vadd.f32 %v2226, %v2337
      %v2348 = vadd.f32 %v2227, %v2320
      %v2349 = vadd.f32 %v2228, %v2339
      %v2350 = vadd.f32 %v2229, %v2323
      %v2351 = vadd.f32 %v2230, %v2342
      %v2352 = vadd.f32 %v2231, %v2325
      %v2353 = vadd.f32 %v2232, %v2344
      %s2354 = scalar_lea.vmem %s4, 112
      %v2355 = vld [vmem:[%s2354] sm:$0xf]
      %v2356 = vld [vmem:[%s2354 + $0x4] sm:$0xf]
      %v2357 = vld [vmem:[%s2354 + $0x8] sm:$0xf]
      %v2358 = vld [vmem:[%s2354 + $0xc] sm:$0xf]
      %v2363 = vunpack.c.l.b16 %v2355
      %v2364 = vunpack.c.l.b16 %v2356
      %v2365 = vunpack.c.l.b16 %v2357
      %v2366 = vunpack.c.l.b16 %v2358
      %v2367 = vpack.c.b16 %v2364, %v2363
      %v2368 = vpack.c.b16 %v2366, %v2365
      %2369 = vrot.lane.b32.xlu0 %v1705, 95
      %v2370 = vpop.permute.xlu0 %2369
      %2371 = vrot.lane.b32.xlu0 %v1706, 95
      %v2372 = vpop.permute.xlu0 %2371
      %2373 = vrot.lane.b32.xlu0 %v1707, 95
      %v2374 = vpop.permute.xlu0 %2373
      %2375 = vrot.lane.b32.xlu0 %v1708, 95
      %v2376 = vpop.permute.xlu0 %2375
      %2377 = vrot.lane.b32.xlu0 %v1709, 95
      %v2378 = vpop.permute.xlu0 %2377
      %2379 = vrot.lane.b32.xlu0 %v1710, 95
      %v2380 = vpop.permute.xlu0 %2379
      %v2381 = vsel %vm1294, %v2370, %v2372
      %v2382 = vsel %vm1294, %v2372, %v2374
      %v2383 = vsel %vm1294, %v2376, %v2378
      %v2384 = vsel %vm1294, %v2378, %v2380
      %v2390 = vsel %vm433, %v2367, 0
      %v2393 = vsel %vm433, %v2368, 0
      %2395 = vmatpush.bf16.msra.mxu0 0
      %2396 = vmatpush.bf16.msra.mxu0 0
      %2397 = vmatpush.bf16.msra.mxu0 0
      %2398 = vmatpush.bf16.msra.mxu0 0
      %2399 = vmatpush.bf16.msra.mxu0 0
      %2400 = vmatpush.bf16.msra.mxu0 0
      %2401 = vmatpush.bf16.msra.mxu0 %v2383
      %2402 = vmatpush.bf16.msra.mxu0 %v2381
      %2403 = vmatmul.bf16.gmra.mxu0 %v2390
      %v2404 = vpop.f32.mrf.mxu0
      %v2405 = vadd.f32 0.0, %v2404
      %v2406 = vpop.f32.mrf.mxu0
      %v2407 = vadd.f32 0.0, %v2406
      %2408 = vmatmul.bf16.gmra.mxu0 %v2393
      %v2409 = vpop.f32.mrf.mxu0
      %v2410 = vadd.f32 0.0, %v2409
      %v2411 = vpop.f32.mrf.mxu0
      %v2412 = vadd.f32 0.0, %v2411
      %2413 = vdwg.mxu0
      %2414 = vmatpush.bf16.msra.mxu0 0
      %2415 = vmatpush.bf16.msra.mxu0 0
      %2416 = vmatpush.bf16.msra.mxu0 0
      %2417 = vmatpush.bf16.msra.mxu0 0
      %2418 = vmatpush.bf16.msra.mxu0 0
      %2419 = vmatpush.bf16.msra.mxu0 0
      %2420 = vmatpush.bf16.msra.mxu0 %v2384
      %2421 = vmatpush.bf16.msra.mxu0 %v2382
      %2422 = vmatmul.bf16.gmra.mxu0 %v2390
      %v2423 = vpop.f32.mrf.mxu0
      %v2424 = vadd.f32 0.0, %v2423
      %v2425 = vpop.f32.mrf.mxu0
      %v2426 = vadd.f32 0.0, %v2425
      %2427 = vmatmul.bf16.gmra.mxu0 %v2393
      %v2428 = vpop.f32.mrf.mxu0
      %v2429 = vadd.f32 0.0, %v2428
      %v2430 = vpop.f32.mrf.mxu0
      %v2431 = vadd.f32 0.0, %v2430
      %2432 = vdwg.mxu0
      %v2433 = vadd.f32 %v2346, %v2405
      %v2434 = vadd.f32 %v2347, %v2424
      %v2435 = vadd.f32 %v2348, %v2407
      %v2436 = vadd.f32 %v2349, %v2426
      %v2437 = vadd.f32 %v2350, %v2410
      %v2438 = vadd.f32 %v2351, %v2429
      %v2439 = vadd.f32 %v2352, %v2412
      %v2440 = vadd.f32 %v2353, %v2431
      %v2441 = vsel %vm1366, %v1662, 0
      %v2442 = vsel %vm1373, %v1663, 0
      %v2443 = vsel %vm1366, %v1664, 0
      %v2444 = vsel %vm1373, %v1665, 0
      %v2445 = vsel %vm1366, %v1666, 0
      %v2446 = vsel %vm1373, %v1667, 0
      %v2447 = vsel %vm1366, %v1668, 0
      %v2448 = vsel %vm1373, %v1669, 0
      %s2449 = scalar_lea.vmem %s4, 128
      %v2450 = vld [vmem:[%s2449] sm:$0xf]
      %v2451 = vld [vmem:[%s2449 + $0x4] sm:$0xf]
      %v2452 = vld [vmem:[%s2449 + $0x8] sm:$0xf]
      %v2453 = vld [vmem:[%s2449 + $0xc] sm:$0xf]
      %v2458 = vunpack.c.l.b16 %v2450
      %v2459 = vunpack.c.l.b16 %v2451
      %v2460 = vunpack.c.l.b16 %v2452
      %v2461 = vunpack.c.l.b16 %v2453
      %v2462 = vpack.c.b16 %v2459, %v2458
      %v2463 = vpack.c.b16 %v2461, %v2460
      %v2472 = vunpack.c.l.b16 %v2441
      %v2473 = vunpack.c.h.b16 %v2441
      %v2474 = vunpack.c.l.b16 %v2442
      %v2475 = vunpack.c.l.b16 %v2443
      %v2476 = vunpack.c.h.b16 %v2443
      %v2477 = vunpack.c.l.b16 %v2444
      %v2478 = vunpack.c.l.b16 %v2445
      %v2479 = vunpack.c.h.b16 %v2445
      %v2480 = vunpack.c.l.b16 %v2446
      %v2481 = vunpack.c.l.b16 %v2447
      %v2482 = vunpack.c.h.b16 %v2447
      %v2483 = vunpack.c.l.b16 %v2448
      %v2484 = vpack.c.b16 %v2475, %v2472
      %v2485 = vpack.c.b16 %v2476, %v2473
      %v2486 = vpack.c.b16 %v2477, %v2474
      %v2487 = vpack.c.b16 %v2481, %v2478
      %v2488 = vpack.c.b16 %v2482, %v2479
      %v2489 = vpack.c.b16 %v2483, %v2480
      %2490 = vrot.lane.b32.xlu0 %v2484, 94
      %v2491 = vpop.permute.xlu0 %2490
      %2492 = vrot.lane.b32.xlu0 %v2485, 94
      %v2493 = vpop.permute.xlu0 %2492
      %2494 = vrot.lane.b32.xlu0 %v2486, 94
      %v2495 = vpop.permute.xlu0 %2494
      %2496 = vrot.lane.b32.xlu0 %v2487, 94
      %v2497 = vpop.permute.xlu0 %2496
      %2498 = vrot.lane.b32.xlu0 %v2488, 94
      %v2499 = vpop.permute.xlu0 %2498
      %2500 = vrot.lane.b32.xlu0 %v2489, 94
      %v2501 = vpop.permute.xlu0 %2500
      %v2502 = vsel %vm1435, %v2491, %v2493
      %v2503 = vsel %vm1435, %v2493, %v2495
      %v2504 = vsel %vm1435, %v2497, %v2499
      %v2505 = vsel %vm1435, %v2499, %v2501
      %v2511 = vsel %vm433, %v2462, 0
      %v2514 = vsel %vm433, %v2463, 0
      %2516 = vmatpush.bf16.msra.mxu0 0
      %2517 = vmatpush.bf16.msra.mxu0 0
      %2518 = vmatpush.bf16.msra.mxu0 0
      %2519 = vmatpush.bf16.msra.mxu0 0
      %2520 = vmatpush.bf16.msra.mxu0 0
      %2521 = vmatpush.bf16.msra.mxu0 0
      %2522 = vmatpush.bf16.msra.mxu0 %v2504
      %2523 = vmatpush.bf16.msra.mxu0 %v2502
      %2524 = vmatmul.bf16.gmra.mxu0 %v2511
      %v2525 = vpop.f32.mrf.mxu0
      %v2526 = vadd.f32 0.0, %v2525
      %v2527 = vpop.f32.mrf.mxu0
      %v2528 = vadd.f32 0.0, %v2527
      %2529 = vmatmul.bf16.gmra.mxu0 %v2514
      %v2530 = vpop.f32.mrf.mxu0
      %v2531 = vadd.f32 0.0, %v2530
      %v2532 = vpop.f32.mrf.mxu0
      %v2533 = vadd.f32 0.0, %v2532
      %2534 = vdwg.mxu0
      %2535 = vmatpush.bf16.msra.mxu0 0
      %2536 = vmatpush.bf16.msra.mxu0 0
      %2537 = vmatpush.bf16.msra.mxu0 0
      %2538 = vmatpush.bf16.msra.mxu0 0
      %2539 = vmatpush.bf16.msra.mxu0 0
      %2540 = vmatpush.bf16.msra.mxu0 0
      %2541 = vmatpush.bf16.msra.mxu0 %v2505
      %2542 = vmatpush.bf16.msra.mxu0 %v2503
      %2543 = vmatmul.bf16.gmra.mxu0 %v2511
      %v2544 = vpop.f32.mrf.mxu0
      %v2545 = vadd.f32 0.0, %v2544
      %v2546 = vpop.f32.mrf.mxu0
      %v2547 = vadd.f32 0.0, %v2546
      %2548 = vmatmul.bf16.gmra.mxu0 %v2514
      %v2549 = vpop.f32.mrf.mxu0
      %v2550 = vadd.f32 0.0, %v2549
      %v2551 = vpop.f32.mrf.mxu0
      %v2552 = vadd.f32 0.0, %v2551
      %2553 = vdwg.mxu0
      %v2554 = vadd.f32 %v2433, %v2526
      %v2555 = vadd.f32 %v2434, %v2545
      %v2556 = vadd.f32 %v2435, %v2528
      %v2557 = vadd.f32 %v2436, %v2547
      %v2558 = vadd.f32 %v2437, %v2531
      %v2559 = vadd.f32 %v2438, %v2550
      %v2560 = vadd.f32 %v2439, %v2533
      %v2561 = vadd.f32 %v2440, %v2552
      %v2562 = vadd.f32 %v2554, %v310
      %v2563 = vadd.f32 %v2555, %v311
      %v2564 = vadd.f32 %v2556, %v312
      %v2565 = vadd.f32 %v2557, %v313
      %v2566 = vadd.f32 %v2558, %v314
      %v2567 = vadd.f32 %v2559, %v315
      %v2568 = vadd.f32 %v2560, %v316
      %v2569 = vadd.f32 %v2561, %v317
      %v2570 = vmax.f32 %v2562, 0.0
      %v2571 = vmax.f32 %v2563, 0.0
      %v2572 = vmax.f32 %v2564, 0.0
      %v2573 = vmax.f32 %v2565, 0.0
      %v2574 = vmax.f32 %v2566, 0.0
      %v2575 = vmax.f32 %v2567, 0.0
      %v2576 = vmax.f32 %v2568, 0.0
      %v2577 = vmax.f32 %v2569, 0.0
      %2578 = vst [vmem:[%s271] sm:$0xff] %v2570
      %2579 = vst [vmem:[%s271 + $0x8] sm:$0xff] %v2571
      %2580 = vst [vmem:[%s271 + $0x10] sm:$0xff] %v2572
      %2581 = vst [vmem:[%s271 + $0x18] sm:$0xff] %v2573
      %2582 = vst [vmem:[%s271 + $0x20] sm:$0xff] %v2574
      %2583 = vst [vmem:[%s271 + $0x28] sm:$0xff] %v2575
      %2584 = vst [vmem:[%s271 + $0x30] sm:$0xff] %v2576
      %2585 = vst [vmem:[%s271 + $0x38] sm:$0xff] %v2577
      %p2586 = scmp.lt.s32.totalorder %s17, 1
      %s2587 = scalar_select %p2586, %s17, 1
      %s2588 = smul.addr %s2587, 8
      %s2589 = smul.addr %s2588, 8
      %s2590 = scalar_lea.vmem %s6, %s2589
      // Predicated region
      $region45: #{sblock.1} parent=43 // pred_check
        %p2591 = pneg %p171
      $region46: #{sblock.1} parent=43 // pred_check_branch
        %2593 = sbr.rel (%p2591) target = $region48
      $region47: #{sblock.1} parent=43 // pred_region
        _
      $region48: #{sblock.1} parent=43 // pred_fallthru
        _
    $region44: #{sblock.1} parent=5 // pred_fallthru
      _
    %p2594 = scmp.le.s32.totalorder 2, %s12
    // Predicated region
    $region49: #{sblock.1} parent=5 // pred_check
      %p2595 = pneg %p2594
    $region50: #{sblock.1} parent=5 // pred_check_branch
      %2597 = sbr.rel (%p2595) target = $region52
    $region51: #{sblock.1} parent=5 // pred_region
      %s2598 = ssub.s32 %s12, 2
      // Predicated region
      $region53: #{sblock.1} parent=51 // pred_check
        %p2599 = pneg %p177
      $region54: #{sblock.1} parent=51 // pred_check_branch
        %2601 = sbr.rel (%p2599) target = $region56
      $region55: #{sblock.1} parent=51 // pred_region
        %p2602 = scmp.lt.s32.totalorder %s18, 1
        %s2603 = scalar_select %p2602, %s18, 1
        %s2604 = smul.addr %s2603, 8
        %s2605 = smul.addr %s2604, 8
        %s2606 = scalar_lea.vmem %s6, %s2605
      $region56: #{sblock.1} parent=51 // pred_fallthru
        _
    $region52: #{sblock.1} parent=5 // pred_fallthru
      _
  $region6: #{sblock.1} parent=0 // loop_footer
    %s16 = sadd.s32 1, %s12
  $region7: #{sblock.1} parent=0 // loop_footer_branch
    %11 = sbr.rel target = $region3
  $region8: #{sblock.1} parent=0 // loop_exit
    _

</llo_original>
